<compile_context>
chip_gen: v7x
topology: tpu7x:2x2x1
jax: 0.10.0
libtpu: 0.0.40
codegen_flags: <defaults>
</compile_context>

<pallas_src>
import functools
import math

import jax
import jax.numpy as jnp
from jax import lax
from jax.experimental import pallas as pl
from jax.experimental.pallas import tpu as pltpu


# -----------------------------------------------------------------------------
# Pallas kernel: one bidirectional GRU layer. grid=(2,) over direction.
# -----------------------------------------------------------------------------
def _gru_layer_kernel(x_ref, len_ref, wih_ref, bih_ref, whh_ref, bhh_ref,
                      y_ref, hfin_ref, gi_scr):
    # x_ref:    (C, T, Bp, Dc)  input feature chunks (shared by both directions)
    # len_ref:  (Bp, 1) int32   valid lengths (0 for batch-padding rows)
    # wih_ref:  (C, Dc, 3H)     fused r|z|n input weights for this direction
    # bih_ref:  (1, 3H)
    # whh_ref:  (H, 3H)         fused r|z|n hidden weights for this direction
    # bhh_ref:  (1, 3H)
    # y_ref:    (T, Bp, H)      this direction's output slab
    # hfin_ref: (Bp, H)         this direction's final hidden
    # gi_scr:   VMEM (T, Bp, 3H) hoisted input projections
    d = pl.program_id(0)                     # 0 = forward, 1 = backward
    C, T, Bp, Dc = x_ref.shape
    H = whh_ref.shape[0]

    # ---- hoisted input projection: one big MXU matmul per input chunk ----
    gi = jnp.dot(x_ref[0].reshape(T * Bp, Dc), wih_ref[0],
                 preferred_element_type=jnp.float32)
    for c in range(1, C):
        gi = gi + jnp.dot(x_ref[c].reshape(T * Bp, Dc), wih_ref[c],
                          preferred_element_type=jnp.float32)
    gi_scr[...] = (gi + bih_ref[...]).reshape(T, Bp, 3 * H)

    lengths = len_ref[...]                   # (Bp, 1) int32, resident
    whh = whh_ref[...]
    bhh = bhh_ref[...]

    def step(i, h):
        # forward walks t = i, backward walks t = T-1-i (no HBM flips needed)
        t = jnp.where(d == 0, i, T - 1 - i)
        gi_t = gi_scr[t]                                           # (Bp, 3H)
        gh = jnp.dot(h, whh, preferred_element_type=jnp.float32) + bhh
        r = jax.nn.sigmoid(gi_t[:, :H] + gh[:, :H])
        z = jax.nn.sigmoid(gi_t[:, H:2 * H] + gh[:, H:2 * H])
        n = jnp.tanh(gi_t[:, 2 * H:] + r * gh[:, 2 * H:])
        h_new = (1.0 - z) * n + z * h
        h = jnp.where(lengths > t, h_new, h)   # packed-sequence mask
        y_ref[t] = h
        return h

    h_last = lax.fori_loop(0, T, step, jnp.zeros((Bp, H), jnp.float32),
                           unroll=(T <= 16))
    hfin_ref[...] = h_last                    # stored once, after the loop


def gru_layer(x_chunks, lengths_col, wih, bih, whh, bhh):
    """One bidirectional GRU layer.

    x_chunks:    (C, T, Bp, Dc) float32  (C = 1 for layer 0, 2 afterwards)
    lengths_col: (Bp, 1) int32
    wih: (2, C, Dc, 3H)   bih: (2, 1, 3H)   whh: (2, H, 3H)   bhh: (2, 1, 3H)
    returns y: (2, T, Bp, H)  (fwd / bwd chunks), h_fin: (2, Bp, H)
    """
    C, T, Bp, Dc = x_chunks.shape
    H = whh.shape[1]
    TH = 3 * H

    grid_spec = pltpu.PrefetchScalarGridSpec(
        num_scalar_prefetch=0,
        grid=(2,),                                        # direction axis
        in_specs=[
            pl.BlockSpec((C, T, Bp, Dc), lambda d: (0, 0, 0, 0)),
            pl.BlockSpec((Bp, 1), lambda d: (0, 0)),
            pl.BlockSpec((None, C, Dc, TH), lambda d: (d, 0, 0, 0)),
            pl.BlockSpec((None, 1, TH), lambda d: (d, 0, 0)),
            pl.BlockSpec((None, H, TH), lambda d: (d, 0, 0)),
            pl.BlockSpec((None, 1, TH), lambda d: (d, 0, 0)),
        ],
        out_specs=[
            pl.BlockSpec((None, T, Bp, H), lambda d: (d, 0, 0, 0)),
            pl.BlockSpec((None, Bp, H), lambda d: (d, 0, 0)),
        ],
        scratch_shapes=[pltpu.VMEM((T, Bp, TH), jnp.float32)],
    )

    y, h_fin = pl.pallas_call(
        _gru_layer_kernel,
        out_shape=(
            jax.ShapeDtypeStruct((2, T, Bp, H), jnp.float32),
            jax.ShapeDtypeStruct((2, Bp, H), jnp.float32),
        ),
        grid_spec=grid_spec,
        compiler_params=pltpu.CompilerParams(
            dimension_semantics=("parallel",),   # fwd/bwd on the 2 TCs of v7x
            vmem_limit_bytes=64 * 1024 * 1024,
        ),
    )(x_chunks, lengths_col, wih, bih, whh, bhh)
    return y, h_fin


# -----------------------------------------------------------------------------
# Pallas kernel: MLP head  Linear -> BatchNorm1d(eval) -> ReLU -> Linear
# -----------------------------------------------------------------------------
def _mlp_kernel(h_ref, w1_ref, b1_ref, bns_ref, bnt_ref, w2_ref, b2_ref, o_ref):
    h = h_ref[...]
    z1 = jnp.dot(h, w1_ref[...], preferred_element_type=jnp.float32) + b1_ref[...]
    z1 = z1 * bns_ref[...] + bnt_ref[...]          # eval-mode batch norm
    a = jnp.maximum(z1, 0.0)
    o_ref[...] = jnp.dot(a, w2_ref[...], preferred_element_type=jnp.float32) + b2_ref[...]


def mlp_head(hidden, w1, b1, bn_scale, bn_shift, w2, b2):
    B = hidden.shape[0]
    d_model = w2.shape[-1]
    return pl.pallas_call(
        _mlp_kernel,
        out_shape=jax.ShapeDtypeStruct((B, d_model), jnp.float32),
    )(hidden, w1, b1, bn_scale, bn_shift, w2, b2)


# -----------------------------------------------------------------------------
# Full forward pass (glue in plain JAX, hot loops in Pallas)
# -----------------------------------------------------------------------------
def gru_encoder_forward(enc_seq, src_pos, params, n_layers):
    B, T, d_word = enc_seq.shape
    Bp = ((B + 7) // 8) * 8                          # pad batch to 8 sublanes

    lengths = jnp.max(src_pos, axis=1).astype(jnp.int32)            # (B,)
    lengths_col = jnp.pad(lengths, (0, Bp - B))[:, None]            # (Bp, 1)

    x = jnp.transpose(enc_seq, (1, 0, 2)).astype(jnp.float32)       # (T, B, d_word)
    x = jnp.pad(x, ((0, 0), (0, Bp - B), (0, 0)))                   # (T, Bp, d_word)
    x_chunks = x[None]                                              # (1, T, Bp, d_word)

    finals = []
    for layer in range(n_layers):
        p = params["gru"][layer]
        y, h_fin = gru_layer(x_chunks, lengths_col,
                             p["wih"], p["bih"], p["whh"], p["bhh"])
        finals.append(h_fin)      # (2, Bp, H), PyTorch order: l_k fwd, l_k bwd
        x_chunks = y              # next layer consumes the 2 chunks directly

    hidden = jnp.concatenate(finals, axis=0)                        # (2*L, Bp, H)
    hidden = jnp.transpose(hidden, (1, 0, 2)).reshape(Bp, -1)[:B]   # (B, 2*L*H)

    m = params["mlp"]
    return mlp_head(hidden, m["w1"], m["b1"], m["bn_scale"], m["bn_shift"],
                    m["w2"], m["b2"])


# -----------------------------------------------------------------------------
# Deterministic parameter init (shapes follow nn.GRU / nn.Linear / BatchNorm1d,
# with the 3 gates fused along the last dim and the layer>=1 input split into
# the two direction chunks)
# -----------------------------------------------------------------------------
def init_params(key, d_word, d_model, n_layers):
    k = 1.0 / math.sqrt(d_model)
    gru_params = []
    for layer in range(n_layers):
        C = 1 if layer == 0 else 2
        Dc = d_word if layer == 0 else d_model
        key, k0, k1, k2, k3 = jax.random.split(key, 5)
        gru_params.append(dict(
            wih=jax.random.uniform(k0, (2, C, Dc, 3 * d_model), jnp.float32, -k, k),
            whh=jax.random.uniform(k1, (2, d_model, 3 * d_model), jnp.float32, -k, k),
            bih=jax.random.uniform(k2, (2, 1, 3 * d_model), jnp.float32, -k, k),
            bhh=jax.random.uniform(k3, (2, 1, 3 * d_model), jnp.float32, -k, k),
        ))

    d_in_mlp = 2 * n_layers * d_model
    key, k0, k1, k2, k3 = jax.random.split(key, 5)
    lim1 = 1.0 / math.sqrt(d_in_mlp)
    lim2 = 1.0 / math.sqrt(d_model)
    w1 = jax.random.uniform(k0, (d_in_mlp, d_model), jnp.float32, -lim1, lim1)
    b1 = jax.random.uniform(k1, (1, d_model), jnp.float32, -lim1, lim1)
    w2 = jax.random.uniform(k2, (d_model, d_model), jnp.float32, -lim2, lim2)
    b2 = jax.random.uniform(k3, (1, d_model), jnp.float32, -lim2, lim2)

    # BatchNorm1d defaults: gamma=1, beta=0, running_mean=0, running_var=1 (eval)
    eps = 1e-5
    gamma = jnp.ones((1, d_model), jnp.float32)
    beta = jnp.zeros((1, d_model), jnp.float32)
    running_mean = jnp.zeros((1, d_model), jnp.float32)
    running_var = jnp.ones((1, d_model), jnp.float32)
    bn_scale = gamma / jnp.sqrt(running_var + eps)
    bn_shift = beta - running_mean * bn_scale

    mlp = dict(w1=w1, b1=b1, w2=w2, b2=b2, bn_scale=bn_scale, bn_shift=bn_shift)
    return {"gru": gru_params, "mlp": mlp}


# -----------------------------------------------------------------------------
# Pure-JAX reference (sanity check only; runs on the un-padded batch)
# -----------------------------------------------------------------------------
def _gru_dir_ref(x_chunks, lengths, wih_d, bih_d, whh_d, bhh_d, reverse):
    C, T, B, Dc = x_chunks.shape
    H = whh_d.shape[0]
    hp = functools.partial(jnp.matmul, precision=lax.Precision.HIGHEST)
    gi = sum(hp(x_chunks[c], wih_d[c]) for c in range(C)) + bih_d   # (T, B, 3H)

    order = jnp.arange(T)[::-1] if reverse else jnp.arange(T)

    def step(h, t):
        gi_t = gi[t]
        gh = hp(h, whh_d) + bhh_d
        r = jax.nn.sigmoid(gi_t[:, :H] + gh[:, :H])
        z = jax.nn.sigmoid(gi_t[:, H:2 * H] + gh[:, H:2 * H])
        n = jnp.tanh(gi_t[:, 2 * H:] + r * gh[:, 2 * H:])
        h_new = (1.0 - z) * n + z * h
        h = jnp.where(lengths[:, None] > t, h_new, h)
        return h, h

    h_fin, ys = lax.scan(step, jnp.zeros((B, H), jnp.float32), order)
    y = jnp.flip(ys, 0) if reverse else ys
    return y, h_fin


def gru_encoder_ref(enc_seq, src_pos, params, n_layers):
    B, T, _ = enc_seq.shape
    lengths = jnp.max(src_pos, axis=1).astype(jnp.int32)
    x = jnp.transpose(enc_seq, (1, 0, 2)).astype(jnp.float32)[None]  # (1,T,B,dw)
    hp = functools.partial(jnp.matmul, precision=lax.Precision.HIGHEST)

    finals = []
    for layer in range(n_layers):
        p = params["gru"][layer]
        y_f, h_f = _gru_dir_ref(x, lengths, p["wih"][0], p["bih"][0],
                                p["whh"][0], p["bhh"][0], reverse=False)
        y_b, h_b = _gru_dir_ref(x, lengths, p["wih"][1], p["bih"][1],
                                p["whh"][1], p["bhh"][1], reverse=True)
        finals.extend([h_f, h_b])
        x = jnp.stack([y_f, y_b], axis=0)          # chunked, matches kernel layout

    hidden = jnp.transpose(jnp.stack(finals, 0), (1, 0, 2)).reshape(B, -1)
    m = params["mlp"]
    z1 = hp(hidden, m["w1"]) + m["b1"]
    z1 = z1 * m["bn_scale"] + m["bn_shift"]
    a = jnp.maximum(z1, 0.0)
    return hp(a, m["w2"]) + m["b2"]


# -----------------------------------------------------------------------------
if __name__ == "__main__":
    d_word, d_model, n_layers = 16, 32, 2
    batch, seq = 4, 8

    key = jax.random.PRNGKey(0)
    key, k_x = jax.random.split(key)
    params = init_params(key, d_word, d_model, n_layers)

    enc_seq = jax.random.normal(k_x, (batch, seq, d_word), jnp.float32)

    # src_pos: 1-based positions with 0 padding; lengths sorted descending
    # (pack_padded_sequence with enforce_sorted=True requires this).
    lengths = [8, 7, 5, 3]
    src_pos = jnp.stack([
        jnp.where(jnp.arange(seq) < L, jnp.arange(seq) + 1, 0) for L in lengths
    ]).astype(jnp.int32)

    out = gru_encoder_forward(enc_seq, src_pos, params, n_layers)
    out = jax.block_until_ready(out)
    assert out.shape == (batch, d_model), out.shape

    ref = gru_encoder_ref(enc_seq, src_pos, params, n_layers)
    assert jnp.allclose(out, ref, atol=2e-2, rtol=2e-2), float(jnp.max(jnp.abs(out - ref)))

    print("KERNEL_OK")
</pallas_src>

<mosaic_0001>
module attributes {stable_mosaic.version = 11 : i64} {
  func.func @_gru_layer_kernel(%arg0: i32, %arg1: memref<1x8x8x16xf32, #tpu.memory_space<vmem>>, %arg2: memref<8x1xi32, #tpu.memory_space<vmem>>, %arg3: memref<1x1x16x96xf32, #tpu.memory_space<vmem>>, %arg4: memref<1x1x96xf32, #tpu.memory_space<vmem>>, %arg5: memref<1x32x96xf32, #tpu.memory_space<vmem>>, %arg6: memref<1x1x96xf32, #tpu.memory_space<vmem>>, %arg7: memref<1x8x8x32xf32, #tpu.memory_space<vmem>>, %arg8: memref<1x8x32xf32, #tpu.memory_space<vmem>>, %arg9: memref<8x8x96xf32, #tpu.memory_space<vmem>>) attributes {dimension_semantics = [#tpu.dimension_semantics<parallel>], iteration_bounds = array<i64: 2>, scalar_prefetch = 0 : i64, scratch_operands = 1 : i64, tpu.core_type = #tpu.core_type<tc>, window_params = [{pipeline_mode = #tpu.pipeline_mode<synchronous>, transform_indices = @transform_0, window_bounds = array<i64: 1, 8, 8, 16>}, {pipeline_mode = #tpu.pipeline_mode<synchronous>, transform_indices = @transform_1, window_bounds = array<i64: 8, 1>}, {transform_indices = @transform_2, window_bounds = array<i64: 1, 1, 16, 96>}, {transform_indices = @transform_3, window_bounds = array<i64: 1, 1, 96>}, {transform_indices = @transform_4, window_bounds = array<i64: 1, 32, 96>}, {transform_indices = @transform_5, window_bounds = array<i64: 1, 1, 96>}, {transform_indices = @transform_6, window_bounds = array<i64: 1, 8, 8, 32>}, {transform_indices = @transform_7, window_bounds = array<i64: 1, 8, 32>}]} {
    %c0 = arith.constant 0 : index
    %c0_0 = arith.constant 0 : index
    %c0_1 = arith.constant 0 : index
    %c0_2 = arith.constant 0 : index
    %0 = vector.load %arg1[%c0, %c0_0, %c0_1, %c0_2] : memref<1x8x8x16xf32, #tpu.memory_space<vmem>>, vector<1x8x8x16xf32>
    %1 = vector.shape_cast %0 : vector<1x8x8x16xf32> to vector<8x8x16xf32>
    %2 = vector.shape_cast %1 : vector<8x8x16xf32> to vector<64x16xf32>
    %c0_3 = arith.constant 0 : index
    %c0_4 = arith.constant 0 : index
    %c0_5 = arith.constant 0 : index
    %c0_6 = arith.constant 0 : index
    %3 = vector.load %arg3[%c0_3, %c0_4, %c0_5, %c0_6] : memref<1x1x16x96xf32, #tpu.memory_space<vmem>>, vector<1x1x16x96xf32>
    %4 = vector.shape_cast %3 : vector<1x1x16x96xf32> to vector<16x96xf32>
    %cst = arith.constant dense<0.000000e+00> : vector<64x96xf32>
    %5 = tpu.matmul %2, %4, %cst {dimension_numbers = #tpu.dot_dimension_numbers<[1], [0], [0], [1], [0, 0, 1, 1], [], []>} : vector<64x16xf32>, vector<16x96xf32>, vector<64x96xf32> -> vector<64x96xf32>
    %c0_7 = arith.constant 0 : index
    %c0_8 = arith.constant 0 : index
    %c0_9 = arith.constant 0 : index
    %6 = vector.load %arg4[%c0_7, %c0_8, %c0_9] : memref<1x1x96xf32, #tpu.memory_space<vmem>>, vector<1x1x96xf32>
    %7 = vector.shape_cast %6 : vector<1x1x96xf32> to vector<1x96xf32>
    %8 = vector.broadcast %7 : vector<1x96xf32> to vector<64x96xf32>
    %9 = arith.addf %5, %8 : vector<64x96xf32>
    %10 = vector.shape_cast %9 : vector<64x96xf32> to vector<8x8x96xf32>
    %c0_10 = arith.constant 0 : index
    %c0_11 = arith.constant 0 : index
    %c0_12 = arith.constant 0 : index
    %11 = vector.load %arg9[%c0_10, %c0_11, %c0_12] : memref<8x8x96xf32, #tpu.memory_space<vmem>>, vector<8x8x96xf32>
    tpu.vector_store %arg9[%c0_10, %c0_11, %c0_12], %10 {strides = array<i32>} : memref<8x8x96xf32, #tpu.memory_space<vmem>>, vector<8x8x96xf32>,
    %c0_13 = arith.constant 0 : index
    %c0_14 = arith.constant 0 : index
    %12 = vector.load %arg2[%c0_13, %c0_14] : memref<8x1xi32, #tpu.memory_space<vmem>>, vector<8x1xi32>
    %c0_15 = arith.constant 0 : index
    %c0_16 = arith.constant 0 : index
    %c0_17 = arith.constant 0 : index
    %13 = vector.load %arg5[%c0_15, %c0_16, %c0_17] : memref<1x32x96xf32, #tpu.memory_space<vmem>>, vector<1x32x96xf32>
    %14 = vector.shape_cast %13 : vector<1x32x96xf32> to vector<32x96xf32>
    %c0_18 = arith.constant 0 : index
    %c0_19 = arith.constant 0 : index
    %c0_20 = arith.constant 0 : index
    %15 = vector.load %arg6[%c0_18, %c0_19, %c0_20] : memref<1x1x96xf32, #tpu.memory_space<vmem>>, vector<1x1x96xf32>
    %16 = vector.shape_cast %15 : vector<1x1x96xf32> to vector<1x96xf32>
    %cst_21 = arith.constant 0.000000e+00 : f32
    %17 = vector.broadcast %cst_21 : f32 to vector<8x32xf32>
    %c0_i32 = arith.constant 0 : i32
    %c0_i32_22 = arith.constant 0 : i32
    %18 = arith.cmpi eq, %arg0, %c0_i32_22 : i32
    %c7_i32 = arith.constant 7 : i32
    %19 = arith.subi %c7_i32, %c0_i32 : i32
    %20 = arith.select %18, %c0_i32, %19 : i32
    %21 = arith.index_cast %20 : i32 to index
    %c0_23 = arith.constant 0 : index
    %c0_24 = arith.constant 0 : index
    %22 = vector.load %arg9[%21, %c0_23, %c0_24] : memref<8x8x96xf32, #tpu.memory_space<vmem>>, vector<1x8x96xf32>
    %23 = vector.shape_cast %22 : vector<1x8x96xf32> to vector<8x96xf32>
    %cst_25 = arith.constant dense<0.000000e+00> : vector<8x96xf32>
    %24 = tpu.matmul %17, %14, %cst_25 {dimension_numbers = #tpu.dot_dimension_numbers<[1], [0], [0], [1], [0, 0, 1, 1], [], []>} : vector<8x32xf32>, vector<32x96xf32>, vector<8x96xf32> -> vector<8x96xf32>
    %25 = vector.broadcast %16 : vector<1x96xf32> to vector<8x96xf32>
    %26 = arith.addf %24, %25 : vector<8x96xf32>
    %27 = vector.extract_strided_slice %23 {offsets = [0, 0], sizes = [8, 32], strides = [1, 1]} : vector<8x96xf32> to vector<8x32xf32>
    %28 = vector.extract_strided_slice %26 {offsets = [0, 0], sizes = [8, 32], strides = [1, 1]} : vector<8x96xf32> to vector<8x32xf32>
    %29 = arith.addf %27, %28 : vector<8x32xf32>
    %30 = arith.negf %29 : vector<8x32xf32>
    %31 = math.exp %30 : vector<8x32xf32>
    %cst_26 = arith.constant 1.000000e+00 : f32
    %32 = vector.broadcast %cst_26 : f32 to vector<8x32xf32>
    %33 = arith.addf %32, %31 : vector<8x32xf32>
    %34 = arith.divf %32, %33 : vector<8x32xf32>
    %35 = vector.extract_strided_slice %23 {offsets = [0, 32], sizes = [8, 32], strides = [1, 1]} : vector<8x96xf32> to vector<8x32xf32>
    %36 = vector.extract_strided_slice %26 {offsets = [0, 32], sizes = [8, 32], strides = [1, 1]} : vector<8x96xf32> to vector<8x32xf32>
    %37 = arith.addf %35, %36 : vector<8x32xf32>
    %38 = arith.negf %37 : vector<8x32xf32>
    %39 = math.exp %38 : vector<8x32xf32>
    %cst_27 = arith.constant 1.000000e+00 : f32
    %40 = vector.broadcast %cst_27 : f32 to vector<8x32xf32>
    %41 = arith.addf %40, %39 : vector<8x32xf32>
    %42 = arith.divf %40, %41 : vector<8x32xf32>
    %43 = vector.extract_strided_slice %23 {offsets = [0, 64], sizes = [8, 32], strides = [1, 1]} : vector<8x96xf32> to vector<8x32xf32>
    %44 = vector.extract_strided_slice %26 {offsets = [0, 64], sizes = [8, 32], strides = [1, 1]} : vector<8x96xf32> to vector<8x32xf32>
    %45 = arith.mulf %34, %44 : vector<8x32xf32>
    %46 = arith.addf %43, %45 : vector<8x32xf32>
    %47 = math.tanh %46 : vector<8x32xf32>
    %cst_28 = arith.constant 1.000000e+00 : f32
    %48 = vector.broadcast %cst_28 : f32 to vector<8x32xf32>
    %49 = arith.subf %48, %42 : vector<8x32xf32>
    %50 = arith.mulf %49, %47 : vector<8x32xf32>
    %51 = arith.mulf %42, %17 : vector<8x32xf32>
    %52 = arith.addf %50, %51 : vector<8x32xf32>
    %53 = vector.broadcast %20 : i32 to vector<8x1xi32>
    %54 = arith.cmpi sgt, %12, %53 : vector<8x1xi32>
    %55 = vector.shape_cast %54 : vector<8x1xi1> to vector<8x1xi1>
    %56 = vector.broadcast %55 : vector<8x1xi1> to vector<8x32xi1>
    %57 = arith.select %56, %52, %17 : vector<8x32xi1>, vector<8x32xf32>
    %c0_29 = arith.constant 0 : index
    %58 = arith.index_cast %20 : i32 to index
    %c0_30 = arith.constant 0 : index
    %c0_31 = arith.constant 0 : index
    %59 = vector.load %arg7[%c0_29, %58, %c0_30, %c0_31] : memref<1x8x8x32xf32, #tpu.memory_space<vmem>>, vector<1x1x8x32xf32>
    %60 = vector.shape_cast %59 : vector<1x1x8x32xf32> to vector<8x32xf32>
    %61 = vector.shape_cast %57 : vector<8x32xf32> to vector<1x1x8x32xf32>
    tpu.vector_store %arg7[%c0_29, %58, %c0_30, %c0_31], %61 {strides = array<i32>} : memref<1x8x8x32xf32, #tpu.memory_space<vmem>>, vector<1x1x8x32xf32>,
    %c1_i32 = arith.constant 1 : i32
    %c0_i32_32 = arith.constant 0 : i32
    %62 = arith.cmpi eq, %arg0, %c0_i32_32 : i32
    %c7_i32_33 = arith.constant 7 : i32
    %63 = arith.subi %c7_i32_33, %c1_i32 : i32
    %64 = arith.select %62, %c1_i32, %63 : i32
    %65 = arith.index_cast %64 : i32 to index
    %c0_34 = arith.constant 0 : index
    %c0_35 = arith.constant 0 : index
    %66 = vector.load %arg9[%65, %c0_34, %c0_35] : memref<8x8x96xf32, #tpu.memory_space<vmem>>, vector<1x8x96xf32>
    %67 = vector.shape_cast %66 : vector<1x8x96xf32> to vector<8x96xf32>
    %cst_36 = arith.constant dense<0.000000e+00> : vector<8x96xf32>
    %68 = tpu.matmul %57, %14, %cst_36 {dimension_numbers = #tpu.dot_dimension_numbers<[1], [0], [0], [1], [0, 0, 1, 1], [], []>} : vector<8x32xf32>, vector<32x96xf32>, vector<8x96xf32> -> vector<8x96xf32>
    %69 = vector.broadcast %16 : vector<1x96xf32> to vector<8x96xf32>
    %70 = arith.addf %68, %69 : vector<8x96xf32>
    %71 = vector.extract_strided_slice %67 {offsets = [0, 0], sizes = [8, 32], strides = [1, 1]} : vector<8x96xf32> to vector<8x32xf32>
    %72 = vector.extract_strided_slice %70 {offsets = [0, 0], sizes = [8, 32], strides = [1, 1]} : vector<8x96xf32> to vector<8x32xf32>
    %73 = arith.addf %71, %72 : vector<8x32xf32>
    %74 = arith.negf %73 : vector<8x32xf32>
    %75 = math.exp %74 : vector<8x32xf32>
    %cst_37 = arith.constant 1.000000e+00 : f32
    %76 = vector.broadcast %cst_37 : f32 to vector<8x32xf32>
    %77 = arith.addf %76, %75 : vector<8x32xf32>
    %78 = arith.divf %76, %77 : vector<8x32xf32>
    %79 = vector.extract_strided_slice %67 {offsets = [0, 32], sizes = [8, 32], strides = [1, 1]} : vector<8x96xf32> to vector<8x32xf32>
    %80 = vector.extract_strided_slice %70 {offsets = [0, 32], sizes = [8, 32], strides = [1, 1]} : vector<8x96xf32> to vector<8x32xf32>
    %81 = arith.addf %79, %80 : vector<8x32xf32>
    %82 = arith.negf %81 : vector<8x32xf32>
    %83 = math.exp %82 : vector<8x32xf32>
    %cst_38 = arith.constant 1.000000e+00 : f32
    %84 = vector.broadcast %cst_38 : f32 to vector<8x32xf32>
    %85 = arith.addf %84, %83 : vector<8x32xf32>
    %86 = arith.divf %84, %85 : vector<8x32xf32>
    %87 = vector.extract_strided_slice %67 {offsets = [0, 64], sizes = [8, 32], strides = [1, 1]} : vector<8x96xf32> to vector<8x32xf32>
    %88 = vector.extract_strided_slice %70 {offsets = [0, 64], sizes = [8, 32], strides = [1, 1]} : vector<8x96xf32> to vector<8x32xf32>
    %89 = arith.mulf %78, %88 : vector<8x32xf32>
    %90 = arith.addf %87, %89 : vector<8x32xf32>
    %91 = math.tanh %90 : vector<8x32xf32>
    %cst_39 = arith.constant 1.000000e+00 : f32
    %92 = vector.broadcast %cst_39 : f32 to vector<8x32xf32>
    %93 = arith.subf %92, %86 : vector<8x32xf32>
    %94 = arith.mulf %93, %91 : vector<8x32xf32>
    %95 = arith.mulf %86, %57 : vector<8x32xf32>
    %96 = arith.addf %94, %95 : vector<8x32xf32>
    %97 = vector.broadcast %64 : i32 to vector<8x1xi32>
    %98 = arith.cmpi sgt, %12, %97 : vector<8x1xi32>
    %99 = vector.shape_cast %98 : vector<8x1xi1> to vector<8x1xi1>
    %100 = vector.broadcast %99 : vector<8x1xi1> to vector<8x32xi1>
    %101 = arith.select %100, %96, %57 : vector<8x32xi1>, vector<8x32xf32>
    %c0_40 = arith.constant 0 : index
    %102 = arith.index_cast %64 : i32 to index
    %c0_41 = arith.constant 0 : index
    %c0_42 = arith.constant 0 : index
    %103 = vector.load %arg7[%c0_40, %102, %c0_41, %c0_42] : memref<1x8x8x32xf32, #tpu.memory_space<vmem>>, vector<1x1x8x32xf32>
    %104 = vector.shape_cast %103 : vector<1x1x8x32xf32> to vector<8x32xf32>
    %105 = vector.shape_cast %101 : vector<8x32xf32> to vector<1x1x8x32xf32>
    tpu.vector_store %arg7[%c0_40, %102, %c0_41, %c0_42], %105 {strides = array<i32>} : memref<1x8x8x32xf32, #tpu.memory_space<vmem>>, vector<1x1x8x32xf32>,
    %c2_i32 = arith.constant 2 : i32
    %c0_i32_43 = arith.constant 0 : i32
    %106 = arith.cmpi eq, %arg0, %c0_i32_43 : i32
    %c7_i32_44 = arith.constant 7 : i32
    %107 = arith.subi %c7_i32_44, %c2_i32 : i32
    %108 = arith.select %106, %c2_i32, %107 : i32
    %109 = arith.index_cast %108 : i32 to index
    %c0_45 = arith.constant 0 : index
    %c0_46 = arith.constant 0 : index
    %110 = vector.load %arg9[%109, %c0_45, %c0_46] : memref<8x8x96xf32, #tpu.memory_space<vmem>>, vector<1x8x96xf32>
    %111 = vector.shape_cast %110 : vector<1x8x96xf32> to vector<8x96xf32>
    %cst_47 = arith.constant dense<0.000000e+00> : vector<8x96xf32>
    %112 = tpu.matmul %101, %14, %cst_47 {dimension_numbers = #tpu.dot_dimension_numbers<[1], [0], [0], [1], [0, 0, 1, 1], [], []>} : vector<8x32xf32>, vector<32x96xf32>, vector<8x96xf32> -> vector<8x96xf32>
    %113 = vector.broadcast %16 : vector<1x96xf32> to vector<8x96xf32>
    %114 = arith.addf %112, %113 : vector<8x96xf32>
    %115 = vector.extract_strided_slice %111 {offsets = [0, 0], sizes = [8, 32], strides = [1, 1]} : vector<8x96xf32> to vector<8x32xf32>
    %116 = vector.extract_strided_slice %114 {offsets = [0, 0], sizes = [8, 32], strides = [1, 1]} : vector<8x96xf32> to vector<8x32xf32>
    %117 = arith.addf %115, %116 : vector<8x32xf32>
    %118 = arith.negf %117 : vector<8x32xf32>
    %119 = math.exp %118 : vector<8x32xf32>
    %cst_48 = arith.constant 1.000000e+00 : f32
    %120 = vector.broadcast %cst_48 : f32 to vector<8x32xf32>
    %121 = arith.addf %120, %119 : vector<8x32xf32>
    %122 = arith.divf %120, %121 : vector<8x32xf32>
    %123 = vector.extract_strided_slice %111 {offsets = [0, 32], sizes = [8, 32], strides = [1, 1]} : vector<8x96xf32> to vector<8x32xf32>
    %124 = vector.extract_strided_slice %114 {offsets = [0, 32], sizes = [8, 32], strides = [1, 1]} : vector<8x96xf32> to vector<8x32xf32>
    %125 = arith.addf %123, %124 : vector<8x32xf32>
    %126 = arith.negf %125 : vector<8x32xf32>
    %127 = math.exp %126 : vector<8x32xf32>
    %cst_49 = arith.constant 1.000000e+00 : f32
    %128 = vector.broadcast %cst_49 : f32 to vector<8x32xf32>
    %129 = arith.addf %128, %127 : vector<8x32xf32>
    %130 = arith.divf %128, %129 : vector<8x32xf32>
    %131 = vector.extract_strided_slice %111 {offsets = [0, 64], sizes = [8, 32], strides = [1, 1]} : vector<8x96xf32> to vector<8x32xf32>
    %132 = vector.extract_strided_slice %114 {offsets = [0, 64], sizes = [8, 32], strides = [1, 1]} : vector<8x96xf32> to vector<8x32xf32>
    %133 = arith.mulf %122, %132 : vector<8x32xf32>
    %134 = arith.addf %131, %133 : vector<8x32xf32>
    %135 = math.tanh %134 : vector<8x32xf32>
    %cst_50 = arith.constant 1.000000e+00 : f32
    %136 = vector.broadcast %cst_50 : f32 to vector<8x32xf32>
    %137 = arith.subf %136, %130 : vector<8x32xf32>
    %138 = arith.mulf %137, %135 : vector<8x32xf32>
    %139 = arith.mulf %130, %101 : vector<8x32xf32>
    %140 = arith.addf %138, %139 : vector<8x32xf32>
    %141 = vector.broadcast %108 : i32 to vector<8x1xi32>
    %142 = arith.cmpi sgt, %12, %141 : vector<8x1xi32>
    %143 = vector.shape_cast %142 : vector<8x1xi1> to vector<8x1xi1>
    %144 = vector.broadcast %143 : vector<8x1xi1> to vector<8x32xi1>
    %145 = arith.select %144, %140, %101 : vector<8x32xi1>, vector<8x32xf32>
    %c0_51 = arith.constant 0 : index
    %146 = arith.index_cast %108 : i32 to index
    %c0_52 = arith.constant 0 : index
    %c0_53 = arith.constant 0 : index
    %147 = vector.load %arg7[%c0_51, %146, %c0_52, %c0_53] : memref<1x8x8x32xf32, #tpu.memory_space<vmem>>, vector<1x1x8x32xf32>
    %148 = vector.shape_cast %147 : vector<1x1x8x32xf32> to vector<8x32xf32>
    %149 = vector.shape_cast %145 : vector<8x32xf32> to vector<1x1x8x32xf32>
    tpu.vector_store %arg7[%c0_51, %146, %c0_52, %c0_53], %149 {strides = array<i32>} : memref<1x8x8x32xf32, #tpu.memory_space<vmem>>, vector<1x1x8x32xf32>,
    %c3_i32 = arith.constant 3 : i32
    %c0_i32_54 = arith.constant 0 : i32
    %150 = arith.cmpi eq, %arg0, %c0_i32_54 : i32
    %c7_i32_55 = arith.constant 7 : i32
    %151 = arith.subi %c7_i32_55, %c3_i32 : i32
    %152 = arith.select %150, %c3_i32, %151 : i32
    %153 = arith.index_cast %152 : i32 to index
    %c0_56 = arith.constant 0 : index
    %c0_57 = arith.constant 0 : index
    %154 = vector.load %arg9[%153, %c0_56, %c0_57] : memref<8x8x96xf32, #tpu.memory_space<vmem>>, vector<1x8x96xf32>
    %155 = vector.shape_cast %154 : vector<1x8x96xf32> to vector<8x96xf32>
    %cst_58 = arith.constant dense<0.000000e+00> : vector<8x96xf32>
    %156 = tpu.matmul %145, %14, %cst_58 {dimension_numbers = #tpu.dot_dimension_numbers<[1], [0], [0], [1], [0, 0, 1, 1], [], []>} : vector<8x32xf32>, vector<32x96xf32>, vector<8x96xf32> -> vector<8x96xf32>
    %157 = vector.broadcast %16 : vector<1x96xf32> to vector<8x96xf32>
    %158 = arith.addf %156, %157 : vector<8x96xf32>
    %159 = vector.extract_strided_slice %155 {offsets = [0, 0], sizes = [8, 32], strides = [1, 1]} : vector<8x96xf32> to vector<8x32xf32>
    %160 = vector.extract_strided_slice %158 {offsets = [0, 0], sizes = [8, 32], strides = [1, 1]} : vector<8x96xf32> to vector<8x32xf32>
    %161 = arith.addf %159, %160 : vector<8x32xf32>
    %162 = arith.negf %161 : vector<8x32xf32>
    %163 = math.exp %162 : vector<8x32xf32>
    %cst_59 = arith.constant 1.000000e+00 : f32
    %164 = vector.broadcast %cst_59 : f32 to vector<8x32xf32>
    %165 = arith.addf %164, %163 : vector<8x32xf32>
    %166 = arith.divf %164, %165 : vector<8x32xf32>
    %167 = vector.extract_strided_slice %155 {offsets = [0, 32], sizes = [8, 32], strides = [1, 1]} : vector<8x96xf32> to vector<8x32xf32>
    %168 = vector.extract_strided_slice %158 {offsets = [0, 32], sizes = [8, 32], strides = [1, 1]} : vector<8x96xf32> to vector<8x32xf32>
    %169 = arith.addf %167, %168 : vector<8x32xf32>
    %170 = arith.negf %169 : vector<8x32xf32>
    %171 = math.exp %170 : vector<8x32xf32>
    %cst_60 = arith.constant 1.000000e+00 : f32
    %172 = vector.broadcast %cst_60 : f32 to vector<8x32xf32>
    %173 = arith.addf %172, %171 : vector<8x32xf32>
    %174 = arith.divf %172, %173 : vector<8x32xf32>
    %175 = vector.extract_strided_slice %155 {offsets = [0, 64], sizes = [8, 32], strides = [1, 1]} : vector<8x96xf32> to vector<8x32xf32>
    %176 = vector.extract_strided_slice %158 {offsets = [0, 64], sizes = [8, 32], strides = [1, 1]} : vector<8x96xf32> to vector<8x32xf32>
    %177 = arith.mulf %166, %176 : vector<8x32xf32>
    %178 = arith.addf %175, %177 : vector<8x32xf32>
    %179 = math.tanh %178 : vector<8x32xf32>
    %cst_61 = arith.constant 1.000000e+00 : f32
    %180 = vector.broadcast %cst_61 : f32 to vector<8x32xf32>
    %181 = arith.subf %180, %174 : vector<8x32xf32>
    %182 = arith.mulf %181, %179 : vector<8x32xf32>
    %183 = arith.mulf %174, %145 : vector<8x32xf32>
    %184 = arith.addf %182, %183 : vector<8x32xf32>
    %185 = vector.broadcast %152 : i32 to vector<8x1xi32>
    %186 = arith.cmpi sgt, %12, %185 : vector<8x1xi32>
    %187 = vector.shape_cast %186 : vector<8x1xi1> to vector<8x1xi1>
    %188 = vector.broadcast %187 : vector<8x1xi1> to vector<8x32xi1>
    %189 = arith.select %188, %184, %145 : vector<8x32xi1>, vector<8x32xf32>
    %c0_62 = arith.constant 0 : index
    %190 = arith.index_cast %152 : i32 to index
    %c0_63 = arith.constant 0 : index
    %c0_64 = arith.constant 0 : index
    %191 = vector.load %arg7[%c0_62, %190, %c0_63, %c0_64] : memref<1x8x8x32xf32, #tpu.memory_space<vmem>>, vector<1x1x8x32xf32>
    %192 = vector.shape_cast %191 : vector<1x1x8x32xf32> to vector<8x32xf32>
    %193 = vector.shape_cast %189 : vector<8x32xf32> to vector<1x1x8x32xf32>
    tpu.vector_store %arg7[%c0_62, %190, %c0_63, %c0_64], %193 {strides = array<i32>} : memref<1x8x8x32xf32, #tpu.memory_space<vmem>>, vector<1x1x8x32xf32>,
    %c4_i32 = arith.constant 4 : i32
    %c0_i32_65 = arith.constant 0 : i32
    %194 = arith.cmpi eq, %arg0, %c0_i32_65 : i32
    %c7_i32_66 = arith.constant 7 : i32
    %195 = arith.subi %c7_i32_66, %c4_i32 : i32
    %196 = arith.select %194, %c4_i32, %195 : i32
    %197 = arith.index_cast %196 : i32 to index
    %c0_67 = arith.constant 0 : index
    %c0_68 = arith.constant 0 : index
    %198 = vector.load %arg9[%197, %c0_67, %c0_68] : memref<8x8x96xf32, #tpu.memory_space<vmem>>, vector<1x8x96xf32>
    %199 = vector.shape_cast %198 : vector<1x8x96xf32> to vector<8x96xf32>
    %cst_69 = arith.constant dense<0.000000e+00> : vector<8x96xf32>
    %200 = tpu.matmul %189, %14, %cst_69 {dimension_numbers = #tpu.dot_dimension_numbers<[1], [0], [0], [1], [0, 0, 1, 1], [], []>} : vector<8x32xf32>, vector<32x96xf32>, vector<8x96xf32> -> vector<8x96xf32>
    %201 = vector.broadcast %16 : vector<1x96xf32> to vector<8x96xf32>
    %202 = arith.addf %200, %201 : vector<8x96xf32>
    %203 = vector.extract_strided_slice %199 {offsets = [0, 0], sizes = [8, 32], strides = [1, 1]} : vector<8x96xf32> to vector<8x32xf32>
    %204 = vector.extract_strided_slice %202 {offsets = [0, 0], sizes = [8, 32], strides = [1, 1]} : vector<8x96xf32> to vector<8x32xf32>
    %205 = arith.addf %203, %204 : vector<8x32xf32>
    %206 = arith.negf %205 : vector<8x32xf32>
    %207 = math.exp %206 : vector<8x32xf32>
    %cst_70 = arith.constant 1.000000e+00 : f32
    %208 = vector.broadcast %cst_70 : f32 to vector<8x32xf32>
    %209 = arith.addf %208, %207 : vector<8x32xf32>
    %210 = arith.divf %208, %209 : vector<8x32xf32>
    %211 = vector.extract_strided_slice %199 {offsets = [0, 32], sizes = [8, 32], strides = [1, 1]} : vector<8x96xf32> to vector<8x32xf32>
    %212 = vector.extract_strided_slice %202 {offsets = [0, 32], sizes = [8, 32], strides = [1, 1]} : vector<8x96xf32> to vector<8x32xf32>
    %213 = arith.addf %211, %212 : vector<8x32xf32>
    %214 = arith.negf %213 : vector<8x32xf32>
    %215 = math.exp %214 : vector<8x32xf32>
    %cst_71 = arith.constant 1.000000e+00 : f32
    %216 = vector.broadcast %cst_71 : f32 to vector<8x32xf32>
    %217 = arith.addf %216, %215 : vector<8x32xf32>
    %218 = arith.divf %216, %217 : vector<8x32xf32>
    %219 = vector.extract_strided_slice %199 {offsets = [0, 64], sizes = [8, 32], strides = [1, 1]} : vector<8x96xf32> to vector<8x32xf32>
    %220 = vector.extract_strided_slice %202 {offsets = [0, 64], sizes = [8, 32], strides = [1, 1]} : vector<8x96xf32> to vector<8x32xf32>
    %221 = arith.mulf %210, %220 : vector<8x32xf32>
    %222 = arith.addf %219, %221 : vector<8x32xf32>
    %223 = math.tanh %222 : vector<8x32xf32>
    %cst_72 = arith.constant 1.000000e+00 : f32
    %224 = vector.broadcast %cst_72 : f32 to vector<8x32xf32>
    %225 = arith.subf %224, %218 : vector<8x32xf32>
    %226 = arith.mulf %225, %223 : vector<8x32xf32>
    %227 = arith.mulf %218, %189 : vector<8x32xf32>
    %228 = arith.addf %226, %227 : vector<8x32xf32>
    %229 = vector.broadcast %196 : i32 to vector<8x1xi32>
    %230 = arith.cmpi sgt, %12, %229 : vector<8x1xi32>
    %231 = vector.shape_cast %230 : vector<8x1xi1> to vector<8x1xi1>
    %232 = vector.broadcast %231 : vector<8x1xi1> to vector<8x32xi1>
    %233 = arith.select %232, %228, %189 : vector<8x32xi1>, vector<8x32xf32>
    %c0_73 = arith.constant 0 : index
    %234 = arith.index_cast %196 : i32 to index
    %c0_74 = arith.constant 0 : index
    %c0_75 = arith.constant 0 : index
    %235 = vector.load %arg7[%c0_73, %234, %c0_74, %c0_75] : memref<1x8x8x32xf32, #tpu.memory_space<vmem>>, vector<1x1x8x32xf32>
    %236 = vector.shape_cast %235 : vector<1x1x8x32xf32> to vector<8x32xf32>
    %237 = vector.shape_cast %233 : vector<8x32xf32> to vector<1x1x8x32xf32>
    tpu.vector_store %arg7[%c0_73, %234, %c0_74, %c0_75], %237 {strides = array<i32>} : memref<1x8x8x32xf32, #tpu.memory_space<vmem>>, vector<1x1x8x32xf32>,
    %c5_i32 = arith.constant 5 : i32
    %c0_i32_76 = arith.constant 0 : i32
    %238 = arith.cmpi eq, %arg0, %c0_i32_76 : i32
    %c7_i32_77 = arith.constant 7 : i32
    %239 = arith.subi %c7_i32_77, %c5_i32 : i32
    %240 = arith.select %238, %c5_i32, %239 : i32
    %241 = arith.index_cast %240 : i32 to index
    %c0_78 = arith.constant 0 : index
    %c0_79 = arith.constant 0 : index
    %242 = vector.load %arg9[%241, %c0_78, %c0_79] : memref<8x8x96xf32, #tpu.memory_space<vmem>>, vector<1x8x96xf32>
    %243 = vector.shape_cast %242 : vector<1x8x96xf32> to vector<8x96xf32>
    %cst_80 = arith.constant dense<0.000000e+00> : vector<8x96xf32>
    %244 = tpu.matmul %233, %14, %cst_80 {dimension_numbers = #tpu.dot_dimension_numbers<[1], [0], [0], [1], [0, 0, 1, 1], [], []>} : vector<8x32xf32>, vector<32x96xf32>, vector<8x96xf32> -> vector<8x96xf32>
    %245 = vector.broadcast %16 : vector<1x96xf32> to vector<8x96xf32>
    %246 = arith.addf %244, %245 : vector<8x96xf32>
    %247 = vector.extract_strided_slice %243 {offsets = [0, 0], sizes = [8, 32], strides = [1, 1]} : vector<8x96xf32> to vector<8x32xf32>
    %248 = vector.extract_strided_slice %246 {offsets = [0, 0], sizes = [8, 32], strides = [1, 1]} : vector<8x96xf32> to vector<8x32xf32>
    %249 = arith.addf %247, %248 : vector<8x32xf32>
    %250 = arith.negf %249 : vector<8x32xf32>
    %251 = math.exp %250 : vector<8x32xf32>
    %cst_81 = arith.constant 1.000000e+00 : f32
    %252 = vector.broadcast %cst_81 : f32 to vector<8x32xf32>
    %253 = arith.addf %252, %251 : vector<8x32xf32>
    %254 = arith.divf %252, %253 : vector<8x32xf32>
    %255 = vector.extract_strided_slice %243 {offsets = [0, 32], sizes = [8, 32], strides = [1, 1]} : vector<8x96xf32> to vector<8x32xf32>
    %256 = vector.extract_strided_slice %246 {offsets = [0, 32], sizes = [8, 32], strides = [1, 1]} : vector<8x96xf32> to vector<8x32xf32>
    %257 = arith.addf %255, %256 : vector<8x32xf32>
    %258 = arith.negf %257 : vector<8x32xf32>
    %259 = math.exp %258 : vector<8x32xf32>
    %cst_82 = arith.constant 1.000000e+00 : f32
    %260 = vector.broadcast %cst_82 : f32 to vector<8x32xf32>
    %261 = arith.addf %260, %259 : vector<8x32xf32>
    %262 = arith.divf %260, %261 : vector<8x32xf32>
    %263 = vector.extract_strided_slice %243 {offsets = [0, 64], sizes = [8, 32], strides = [1, 1]} : vector<8x96xf32> to vector<8x32xf32>
    %264 = vector.extract_strided_slice %246 {offsets = [0, 64], sizes = [8, 32], strides = [1, 1]} : vector<8x96xf32> to vector<8x32xf32>
    %265 = arith.mulf %254, %264 : vector<8x32xf32>
    %266 = arith.addf %263, %265 : vector<8x32xf32>
    %267 = math.tanh %266 : vector<8x32xf32>
    %cst_83 = arith.constant 1.000000e+00 : f32
    %268 = vector.broadcast %cst_83 : f32 to vector<8x32xf32>
    %269 = arith.subf %268, %262 : vector<8x32xf32>
    %270 = arith.mulf %269, %267 : vector<8x32xf32>
    %271 = arith.mulf %262, %233 : vector<8x32xf32>
    %272 = arith.addf %270, %271 : vector<8x32xf32>
    %273 = vector.broadcast %240 : i32 to vector<8x1xi32>
    %274 = arith.cmpi sgt, %12, %273 : vector<8x1xi32>
    %275 = vector.shape_cast %274 : vector<8x1xi1> to vector<8x1xi1>
    %276 = vector.broadcast %275 : vector<8x1xi1> to vector<8x32xi1>
    %277 = arith.select %276, %272, %233 : vector<8x32xi1>, vector<8x32xf32>
    %c0_84 = arith.constant 0 : index
    %278 = arith.index_cast %240 : i32 to index
    %c0_85 = arith.constant 0 : index
    %c0_86 = arith.constant 0 : index
    %279 = vector.load %arg7[%c0_84, %278, %c0_85, %c0_86] : memref<1x8x8x32xf32, #tpu.memory_space<vmem>>, vector<1x1x8x32xf32>
    %280 = vector.shape_cast %279 : vector<1x1x8x32xf32> to vector<8x32xf32>
    %281 = vector.shape_cast %277 : vector<8x32xf32> to vector<1x1x8x32xf32>
    tpu.vector_store %arg7[%c0_84, %278, %c0_85, %c0_86], %281 {strides = array<i32>} : memref<1x8x8x32xf32, #tpu.memory_space<vmem>>, vector<1x1x8x32xf32>,
    %c6_i32 = arith.constant 6 : i32
    %c0_i32_87 = arith.constant 0 : i32
    %282 = arith.cmpi eq, %arg0, %c0_i32_87 : i32
    %c7_i32_88 = arith.constant 7 : i32
    %283 = arith.subi %c7_i32_88, %c6_i32 : i32
    %284 = arith.select %282, %c6_i32, %283 : i32
    %285 = arith.index_cast %284 : i32 to index
    %c0_89 = arith.constant 0 : index
    %c0_90 = arith.constant 0 : index
    %286 = vector.load %arg9[%285, %c0_89, %c0_90] : memref<8x8x96xf32, #tpu.memory_space<vmem>>, vector<1x8x96xf32>
    %287 = vector.shape_cast %286 : vector<1x8x96xf32> to vector<8x96xf32>
    %cst_91 = arith.constant dense<0.000000e+00> : vector<8x96xf32>
    %288 = tpu.matmul %277, %14, %cst_91 {dimension_numbers = #tpu.dot_dimension_numbers<[1], [0], [0], [1], [0, 0, 1, 1], [], []>} : vector<8x32xf32>, vector<32x96xf32>, vector<8x96xf32> -> vector<8x96xf32>
    %289 = vector.broadcast %16 : vector<1x96xf32> to vector<8x96xf32>
    %290 = arith.addf %288, %289 : vector<8x96xf32>
    %291 = vector.extract_strided_slice %287 {offsets = [0, 0], sizes = [8, 32], strides = [1, 1]} : vector<8x96xf32> to vector<8x32xf32>
    %292 = vector.extract_strided_slice %290 {offsets = [0, 0], sizes = [8, 32], strides = [1, 1]} : vector<8x96xf32> to vector<8x32xf32>
    %293 = arith.addf %291, %292 : vector<8x32xf32>
    %294 = arith.negf %293 : vector<8x32xf32>
    %295 = math.exp %294 : vector<8x32xf32>
    %cst_92 = arith.constant 1.000000e+00 : f32
    %296 = vector.broadcast %cst_92 : f32 to vector<8x32xf32>
    %297 = arith.addf %296, %295 : vector<8x32xf32>
    %298 = arith.divf %296, %297 : vector<8x32xf32>
    %299 = vector.extract_strided_slice %287 {offsets = [0, 32], sizes = [8, 32], strides = [1, 1]} : vector<8x96xf32> to vector<8x32xf32>
    %300 = vector.extract_strided_slice %290 {offsets = [0, 32], sizes = [8, 32], strides = [1, 1]} : vector<8x96xf32> to vector<8x32xf32>
    %301 = arith.addf %299, %300 : vector<8x32xf32>
    %302 = arith.negf %301 : vector<8x32xf32>
    %303 = math.exp %302 : vector<8x32xf32>
    %cst_93 = arith.constant 1.000000e+00 : f32
    %304 = vector.broadcast %cst_93 : f32 to vector<8x32xf32>
    %305 = arith.addf %304, %303 : vector<8x32xf32>
    %306 = arith.divf %304, %305 : vector<8x32xf32>
    %307 = vector.extract_strided_slice %287 {offsets = [0, 64], sizes = [8, 32], strides = [1, 1]} : vector<8x96xf32> to vector<8x32xf32>
    %308 = vector.extract_strided_slice %290 {offsets = [0, 64], sizes = [8, 32], strides = [1, 1]} : vector<8x96xf32> to vector<8x32xf32>
    %309 = arith.mulf %298, %308 : vector<8x32xf32>
    %310 = arith.addf %307, %309 : vector<8x32xf32>
    %311 = math.tanh %310 : vector<8x32xf32>
    %cst_94 = arith.constant 1.000000e+00 : f32
    %312 = vector.broadcast %cst_94 : f32 to vector<8x32xf32>
    %313 = arith.subf %312, %306 : vector<8x32xf32>
    %314 = arith.mulf %313, %311 : vector<8x32xf32>
    %315 = arith.mulf %306, %277 : vector<8x32xf32>
    %316 = arith.addf %314, %315 : vector<8x32xf32>
    %317 = vector.broadcast %284 : i32 to vector<8x1xi32>
    %318 = arith.cmpi sgt, %12, %317 : vector<8x1xi32>
    %319 = vector.shape_cast %318 : vector<8x1xi1> to vector<8x1xi1>
    %320 = vector.broadcast %319 : vector<8x1xi1> to vector<8x32xi1>
    %321 = arith.select %320, %316, %277 : vector<8x32xi1>, vector<8x32xf32>
    %c0_95 = arith.constant 0 : index
    %322 = arith.index_cast %284 : i32 to index
    %c0_96 = arith.constant 0 : index
    %c0_97 = arith.constant 0 : index
    %323 = vector.load %arg7[%c0_95, %322, %c0_96, %c0_97] : memref<1x8x8x32xf32, #tpu.memory_space<vmem>>, vector<1x1x8x32xf32>
    %324 = vector.shape_cast %323 : vector<1x1x8x32xf32> to vector<8x32xf32>
    %325 = vector.shape_cast %321 : vector<8x32xf32> to vector<1x1x8x32xf32>
    tpu.vector_store %arg7[%c0_95, %322, %c0_96, %c0_97], %325 {strides = array<i32>} : memref<1x8x8x32xf32, #tpu.memory_space<vmem>>, vector<1x1x8x32xf32>,
    %c7_i32_98 = arith.constant 7 : i32
    %c0_i32_99 = arith.constant 0 : i32
    %326 = arith.cmpi eq, %arg0, %c0_i32_99 : i32
    %c7_i32_100 = arith.constant 7 : i32
    %327 = arith.subi %c7_i32_100, %c7_i32_98 : i32
    %328 = arith.select %326, %c7_i32_98, %327 : i32
    %329 = arith.index_cast %328 : i32 to index
    %c0_101 = arith.constant 0 : index
    %c0_102 = arith.constant 0 : index
    %330 = vector.load %arg9[%329, %c0_101, %c0_102] : memref<8x8x96xf32, #tpu.memory_space<vmem>>, vector<1x8x96xf32>
    %331 = vector.shape_cast %330 : vector<1x8x96xf32> to vector<8x96xf32>
    %cst_103 = arith.constant dense<0.000000e+00> : vector<8x96xf32>
    %332 = tpu.matmul %321, %14, %cst_103 {dimension_numbers = #tpu.dot_dimension_numbers<[1], [0], [0], [1], [0, 0, 1, 1], [], []>} : vector<8x32xf32>, vector<32x96xf32>, vector<8x96xf32> -> vector<8x96xf32>
    %333 = vector.broadcast %16 : vector<1x96xf32> to vector<8x96xf32>
    %334 = arith.addf %332, %333 : vector<8x96xf32>
    %335 = vector.extract_strided_slice %331 {offsets = [0, 0], sizes = [8, 32], strides = [1, 1]} : vector<8x96xf32> to vector<8x32xf32>
    %336 = vector.extract_strided_slice %334 {offsets = [0, 0], sizes = [8, 32], strides = [1, 1]} : vector<8x96xf32> to vector<8x32xf32>
    %337 = arith.addf %335, %336 : vector<8x32xf32>
    %338 = arith.negf %337 : vector<8x32xf32>
    %339 = math.exp %338 : vector<8x32xf32>
    %cst_104 = arith.constant 1.000000e+00 : f32
    %340 = vector.broadcast %cst_104 : f32 to vector<8x32xf32>
    %341 = arith.addf %340, %339 : vector<8x32xf32>
    %342 = arith.divf %340, %341 : vector<8x32xf32>
    %343 = vector.extract_strided_slice %331 {offsets = [0, 32], sizes = [8, 32], strides = [1, 1]} : vector<8x96xf32> to vector<8x32xf32>
    %344 = vector.extract_strided_slice %334 {offsets = [0, 32], sizes = [8, 32], strides = [1, 1]} : vector<8x96xf32> to vector<8x32xf32>
    %345 = arith.addf %343, %344 : vector<8x32xf32>
    %346 = arith.negf %345 : vector<8x32xf32>
    %347 = math.exp %346 : vector<8x32xf32>
    %cst_105 = arith.constant 1.000000e+00 : f32
    %348 = vector.broadcast %cst_105 : f32 to vector<8x32xf32>
    %349 = arith.addf %348, %347 : vector<8x32xf32>
    %350 = arith.divf %348, %349 : vector<8x32xf32>
    %351 = vector.extract_strided_slice %331 {offsets = [0, 64], sizes = [8, 32], strides = [1, 1]} : vector<8x96xf32> to vector<8x32xf32>
    %352 = vector.extract_strided_slice %334 {offsets = [0, 64], sizes = [8, 32], strides = [1, 1]} : vector<8x96xf32> to vector<8x32xf32>
    %353 = arith.mulf %342, %352 : vector<8x32xf32>
    %354 = arith.addf %351, %353 : vector<8x32xf32>
    %355 = math.tanh %354 : vector<8x32xf32>
    %cst_106 = arith.constant 1.000000e+00 : f32
    %356 = vector.broadcast %cst_106 : f32 to vector<8x32xf32>
    %357 = arith.subf %356, %350 : vector<8x32xf32>
    %358 = arith.mulf %357, %355 : vector<8x32xf32>
    %359 = arith.mulf %350, %321 : vector<8x32xf32>
    %360 = arith.addf %358, %359 : vector<8x32xf32>
    %361 = vector.broadcast %328 : i32 to vector<8x1xi32>
    %362 = arith.cmpi sgt, %12, %361 : vector<8x1xi32>
    %363 = vector.shape_cast %362 : vector<8x1xi1> to vector<8x1xi1>
    %364 = vector.broadcast %363 : vector<8x1xi1> to vector<8x32xi1>
    %365 = arith.select %364, %360, %321 : vector<8x32xi1>, vector<8x32xf32>
    %c0_107 = arith.constant 0 : index
    %366 = arith.index_cast %328 : i32 to index
    %c0_108 = arith.constant 0 : index
    %c0_109 = arith.constant 0 : index
    %367 = vector.load %arg7[%c0_107, %366, %c0_108, %c0_109] : memref<1x8x8x32xf32, #tpu.memory_space<vmem>>, vector<1x1x8x32xf32>
    %368 = vector.shape_cast %367 : vector<1x1x8x32xf32> to vector<8x32xf32>
    %369 = vector.shape_cast %365 : vector<8x32xf32> to vector<1x1x8x32xf32>
    tpu.vector_store %arg7[%c0_107, %366, %c0_108, %c0_109], %369 {strides = array<i32>} : memref<1x8x8x32xf32, #tpu.memory_space<vmem>>, vector<1x1x8x32xf32>,
    %c8_i32 = arith.constant 8 : i32
    %c0_110 = arith.constant 0 : index
    %c0_111 = arith.constant 0 : index
    %c0_112 = arith.constant 0 : index
    %370 = vector.load %arg8[%c0_110, %c0_111, %c0_112] : memref<1x8x32xf32, #tpu.memory_space<vmem>>, vector<1x8x32xf32>
    %371 = vector.shape_cast %370 : vector<1x8x32xf32> to vector<8x32xf32>
    %372 = vector.shape_cast %365 : vector<8x32xf32> to vector<1x8x32xf32>
    tpu.vector_store %arg8[%c0_110, %c0_111, %c0_112], %372 {strides = array<i32>} : memref<1x8x32xf32, #tpu.memory_space<vmem>>, vector<1x8x32xf32>,
    return
  }
  func.func @transform_0(%arg0: i32) -> (i32, i32, i32, i32) {
    %c0_i32 = arith.constant 0 : i32
    %c0_i32_0 = arith.constant 0 : i32
    %c0_i32_1 = arith.constant 0 : i32
    %c0_i32_2 = arith.constant 0 : i32
    %c0_i32_3 = arith.constant 0 : i32
    return %c0_i32, %c0_i32_0, %c0_i32_1, %c0_i32_2 : i32, i32, i32, i32
  }
  func.func @transform_1(%arg0: i32) -> (i32, i32) {
    %c0_i32 = arith.constant 0 : i32
    %c0_i32_0 = arith.constant 0 : i32
    %c0_i32_1 = arith.constant 0 : i32
    return %c0_i32, %c0_i32_0 : i32, i32
  }
  func.func @transform_2(%arg0: i32) -> (i32, i32, i32, i32) {
    %c0_i32 = arith.constant 0 : i32
    %c0_i32_0 = arith.constant 0 : i32
    %c0_i32_1 = arith.constant 0 : i32
    %c0_i32_2 = arith.constant 0 : i32
    return %arg0, %c0_i32, %c0_i32_0, %c0_i32_1 : i32, i32, i32, i32
  }
  func.func @transform_3(%arg0: i32) -> (i32, i32, i32) {
    %c0_i32 = arith.constant 0 : i32
    %c0_i32_0 = arith.constant 0 : i32
    %c0_i32_1 = arith.constant 0 : i32
    return %arg0, %c0_i32, %c0_i32_0 : i32, i32, i32
  }
  func.func @transform_4(%arg0: i32) -> (i32, i32, i32) {
    %c0_i32 = arith.constant 0 : i32
    %c0_i32_0 = arith.constant 0 : i32
    %c0_i32_1 = arith.constant 0 : i32
    return %arg0, %c0_i32, %c0_i32_0 : i32, i32, i32
  }
  func.func @transform_5(%arg0: i32) -> (i32, i32, i32) {
    %c0_i32 = arith.constant 0 : i32
    %c0_i32_0 = arith.constant 0 : i32
    %c0_i32_1 = arith.constant 0 : i32
    return %arg0, %c0_i32, %c0_i32_0 : i32, i32, i32
  }
  func.func @transform_6(%arg0: i32) -> (i32, i32, i32, i32) {
    %c0_i32 = arith.constant 0 : i32
    %c0_i32_0 = arith.constant 0 : i32
    %c0_i32_1 = arith.constant 0 : i32
    %c0_i32_2 = arith.constant 0 : i32
    return %arg0, %c0_i32, %c0_i32_0, %c0_i32_1 : i32, i32, i32, i32
  }
  func.func @transform_7(%arg0: i32) -> (i32, i32, i32) {
    %c0_i32 = arith.constant 0 : i32
    %c0_i32_0 = arith.constant 0 : i32
    %c0_i32_1 = arith.constant 0 : i32
    return %arg0, %c0_i32, %c0_i32_0 : i32, i32, i32
  }
}

</mosaic_0001>

<llo_original>
// kernel: tpu_custom_call.1
$region0: #{tpu_custom_call.1}
  #allocation0 [shape = 'u32[]', space=smem, size = 0x4, offset = 0x4, fixed_abs, tag = 'smem constant byte address 0x4 - core index']
  #allocation1 [shape = 'u32[144,128]{1,0:T(1,128)}', space=vmem, size = 0x12000, scoped, tag = 'internal scratch']
  #allocation2 [shape = 'f32[8,8,96]{2,1,0:T(8,128)}', space=vmem, size = 0x8000, scoped, tag = 'scratch operand']
  %s0 = inlined_call_operand.hbm [shape: f32[1,8,8,16], index: 0, kind: input, shape index: {}]
  %s1 = inlined_call_operand.hbm [shape: s32[8,1], index: 1, kind: input, shape index: {}]
  %s2 = inlined_call_operand.hbm [shape: f32[2,1,16,96], index: 2, kind: input, shape index: {}]
  %s3 = inlined_call_operand.hbm [shape: f32[2,1,96], index: 3, kind: input, shape index: {}]
  %s4 = inlined_call_operand.hbm [shape: f32[2,32,96], index: 4, kind: input, shape index: {}]
  %s5 = inlined_call_operand.hbm [shape: f32[2,1,96], index: 5, kind: input, shape index: {}]
  %s6 = inlined_call_operand.hbm [shape: f32[2,8,8,32], index: 6, kind: output, shape index: {0}]
  %s7 = inlined_call_operand.hbm [shape: f32[2,8,32], index: 7, kind: output, shape index: {1}]
  %8 = xla_tuple %s6, %s7
  %s9 = sld [smem:[#allocation0]]
  $region89: #{tpu_custom_call.1} parent=0
    _
  %s11 = ssub.s32 1, %s9
  %s12 = scalar_select 0, %s11, %s9
  $region1: #{tpu_custom_call.1} parent=0
    #allocation3 [shape = 'u8[32768]{0}', space=vmem, size = 0x8000, scoped, tag = 'input window, operand 0, single buffered']
    #allocation4 [shape = 's32[2]{0}', space=sflag, size = 0x8, scoped, tag = 'scoped memory for tpu_custom_call.1']
    #allocation5 [shape = 's32[2]{0}', space=sflag, size = 0x8, scoped, tag = 'scoped memory for tpu_custom_call.1']
    #allocation6 [shape = 'u8[4096]{0}', space=vmem, size = 0x1000, scoped, tag = 'input window, operand 1, single buffered']
    #allocation7 [shape = 's32[1]{0}', space=sflag, size = 0x4, scoped, tag = 'scoped memory for tpu_custom_call.1']
    #allocation8 [shape = 'u8[16384]{0}', space=vmem, size = 0x4000, scoped, tag = 'input window, operand 2']
    #allocation9 [shape = 'u8[1024]{0}', space=vmem, size = 0x400, scoped, tag = 'input window, operand 3']
    #allocation10 [shape = 'u8[32768]{0}', space=vmem, size = 0x8000, scoped, tag = 'input window, operand 4']
    #allocation11 [shape = 'u8[1024]{0}', space=vmem, size = 0x400, scoped, tag = 'input window, operand 5']
    #allocation12 [shape = 'u8[65536]{0}', space=vmem, size = 0x10000, scoped, tag = 'output window, operand 0']
    #allocation13 [shape = 'u8[8192]{0}', space=vmem, size = 0x2000, scoped, tag = 'output window, operand 1']
    #allocation14 [shape = 's32[2]{0}', space=sflag, size = 0x8, scoped, tag = 'scoped memory for tpu_custom_call.1']
    %13 = vsyncpa [#allocation4], 0
    %14 = vsyncpa [#allocation7], 0
    %15 = vsyncpa [#allocation5], 0
    %s16 = scalar_lea.sflag [#allocation5], 1
    %17 = vsyncpa %s16, 0
    %18 = vsyncpa [#allocation14], 0
    %s19 = scalar_lea.sflag [#allocation14], 1
    %20 = vsyncpa %s19, 0
    loop: start=0, step=1, limit=4
    $region2: #{tpu_custom_call.1} parent=1 // loop_pre_header
      _
    $region3: #{tpu_custom_call.1} parent=1 // loop_header
      %s22 = sphi 0, %s26
      %p23 = scmp.ge.s32.totalorder %s22, 4
      %s30 = sphi 0, %s30
      %s32 = sphi 0, %s30
      %s33 = sphi 0, %s32
      %s47 = sphi 0, %s33
      %s51 = sphi 0, %s51
      %s53 = sphi 0, %s51
      %s54 = sphi 0, %s53
      %s68 = sphi 0, %s54
      %s74 = sphi 0, %s76
      %s77 = sphi 0, %s74
      %s78 = sphi 0, %s77
      %s94 = sphi 0, %s78
      %s100 = sphi 0, %s102
      %s103 = sphi 0, %s100
      %s104 = sphi 0, %s103
      %s120 = sphi 0, %s104
      %s126 = sphi 0, %s128
      %s129 = sphi 0, %s126
      %s130 = sphi 0, %s129
      %s146 = sphi 0, %s130
      %s152 = sphi 0, %s154
      %s155 = sphi 0, %s152
      %s156 = sphi 0, %s155
      %s172 = sphi 0, %s156
      %s178 = sphi 0, %s180
      %s181 = sphi 0, %s178
      %s182 = sphi 0, %s181
      %s198 = sphi 0, %s182
      %s204 = sphi 0, %s206
      %s207 = sphi 0, %s204
      %s208 = sphi 0, %s207
      %s224 = sphi 0, %s208
    $region4: #{tpu_custom_call.1} parent=1 // loop_header_branch
      %25 = sbr.rel (%p23) target = $region8
    $region5: #{tpu_custom_call.1} parent=1 // loop_body
      %s27 = ssub.s32 %s22, 1
      %s28 = ssub.s32 %s22, 2
      %s29 = sadd.s32 %s22, 1
      %s31 = sadd.s32 %s30, 1
      %p34 = scmp.eq.s32.totalorder %s22, 1
      %p35 = scmp.ne.s32.totalorder %s30, %s32
      %p36 = scmp.eq.s32.totalorder %s22, 0
      %p37 = por %p35, %p36
      %p38 = scmp.ne.s32.totalorder %s30, %s32
      %p39 = scmp.eq.s32.totalorder %s27, 1
      %p40 = por %p38, %p39
      %p41 = scmp.ne.s32.totalorder %s32, %s33
      %p42 = scmp.eq.s32.totalorder %s27, 0
      %p43 = por %p41, %p42
      %p44 = scmp.ne.s32.totalorder %s32, %s33
      %p45 = scmp.eq.s32.totalorder %s28, 1
      %p46 = por %p44, %p45
      %p48 = scmp.ne.s32.totalorder %s33, %s47
      %p49 = scmp.eq.s32.totalorder %s28, 0
      %p50 = por %p48, %p49
      %s52 = sadd.s32 %s51, 1
      %p55 = scmp.eq.s32.totalorder %s22, 1
      %p56 = scmp.ne.s32.totalorder %s51, %s53
      %p57 = scmp.eq.s32.totalorder %s22, 0
      %p58 = por %p56, %p57
      %p59 = scmp.ne.s32.totalorder %s51, %s53
      %p60 = scmp.eq.s32.totalorder %s27, 1
      %p61 = por %p59, %p60
      %p62 = scmp.ne.s32.totalorder %s53, %s54
      %p63 = scmp.eq.s32.totalorder %s27, 0
      %p64 = por %p62, %p63
      %p65 = scmp.ne.s32.totalorder %s53, %s54
      %p66 = scmp.eq.s32.totalorder %s28, 1
      %p67 = por %p65, %p66
      %p69 = scmp.ne.s32.totalorder %s54, %s68
      %p70 = scmp.eq.s32.totalorder %s28, 0
      %p71 = por %p69, %p70
      %s72 = ssub.s32 %s22, %s29
      %p73 = scmp.eq.s32.totalorder %s72, 0
      %s75 = sadd.s32 %s74, 1
      %s76 = scalar_select %p73, %s74, %s75
      %p79 = pneg %p73
      %p80 = scmp.eq.s32.totalorder %s22, 1
      %p81 = por %p79, %p80
      %p82 = scmp.ne.s32.totalorder %s74, %s77
      %p83 = scmp.eq.s32.totalorder %s22, 0
      %p84 = por %p82, %p83
      %p85 = scmp.ne.s32.totalorder %s74, %s77
      %p86 = scmp.eq.s32.totalorder %s27, 1
      %p87 = por %p85, %p86
      %p88 = scmp.ne.s32.totalorder %s77, %s78
      %p89 = scmp.eq.s32.totalorder %s27, 0
      %p90 = por %p88, %p89
      %p91 = scmp.ne.s32.totalorder %s77, %s78
      %p92 = scmp.eq.s32.totalorder %s28, 1
      %p93 = por %p91, %p92
      %p95 = scmp.ne.s32.totalorder %s78, %s94
      %p96 = scmp.eq.s32.totalorder %s28, 0
      %p97 = por %p95, %p96
      %s98 = ssub.s32 %s22, %s29
      %p99 = scmp.eq.s32.totalorder %s98, 0
      %s101 = sadd.s32 %s100, 1
      %s102 = scalar_select %p99, %s100, %s101
      %p105 = pneg %p99
      %p106 = scmp.eq.s32.totalorder %s22, 1
      %p107 = por %p105, %p106
      %p108 = scmp.ne.s32.totalorder %s100, %s103
      %p109 = scmp.eq.s32.totalorder %s22, 0
      %p110 = por %p108, %p109
      %p111 = scmp.ne.s32.totalorder %s100, %s103
      %p112 = scmp.eq.s32.totalorder %s27, 1
      %p113 = por %p111, %p112
      %p114 = scmp.ne.s32.totalorder %s103, %s104
      %p115 = scmp.eq.s32.totalorder %s27, 0
      %p116 = por %p114, %p115
      %p117 = scmp.ne.s32.totalorder %s103, %s104
      %p118 = scmp.eq.s32.totalorder %s28, 1
      %p119 = por %p117, %p118
      %p121 = scmp.ne.s32.totalorder %s104, %s120
      %p122 = scmp.eq.s32.totalorder %s28, 0
      %p123 = por %p121, %p122
      %s124 = ssub.s32 %s22, %s29
      %p125 = scmp.eq.s32.totalorder %s124, 0
      %s127 = sadd.s32 %s126, 1
      %s128 = scalar_select %p125, %s126, %s127
      %p131 = pneg %p125
      %p132 = scmp.eq.s32.totalorder %s22, 1
      %p133 = por %p131, %p132
      %p134 = scmp.ne.s32.totalorder %s126, %s129
      %p135 = scmp.eq.s32.totalorder %s22, 0
      %p136 = por %p134, %p135
      %p137 = scmp.ne.s32.totalorder %s126, %s129
      %p138 = scmp.eq.s32.totalorder %s27, 1
      %p139 = por %p137, %p138
      %p140 = scmp.ne.s32.totalorder %s129, %s130
      %p141 = scmp.eq.s32.totalorder %s27, 0
      %p142 = por %p140, %p141
      %p143 = scmp.ne.s32.totalorder %s129, %s130
      %p144 = scmp.eq.s32.totalorder %s28, 1
      %p145 = por %p143, %p144
      %p147 = scmp.ne.s32.totalorder %s130, %s146
      %p148 = scmp.eq.s32.totalorder %s28, 0
      %p149 = por %p147, %p148
      %s150 = ssub.s32 %s22, %s29
      %p151 = scmp.eq.s32.totalorder %s150, 0
      %s153 = sadd.s32 %s152, 1
      %s154 = scalar_select %p151, %s152, %s153
      %p157 = pneg %p151
      %p158 = scmp.eq.s32.totalorder %s22, 1
      %p159 = por %p157, %p158
      %p160 = scmp.ne.s32.totalorder %s152, %s155
      %p161 = scmp.eq.s32.totalorder %s22, 0
      %p162 = por %p160, %p161
      %p163 = scmp.ne.s32.totalorder %s152, %s155
      %p164 = scmp.eq.s32.totalorder %s27, 1
      %p165 = por %p163, %p164
      %p166 = scmp.ne.s32.totalorder %s155, %s156
      %p167 = scmp.eq.s32.totalorder %s27, 0
      %p168 = por %p166, %p167
      %p169 = scmp.ne.s32.totalorder %s155, %s156
      %p170 = scmp.eq.s32.totalorder %s28, 1
      %p171 = por %p169, %p170
      %p173 = scmp.ne.s32.totalorder %s156, %s172
      %p174 = scmp.eq.s32.totalorder %s28, 0
      %p175 = por %p173, %p174
      %s176 = ssub.s32 %s22, %s29
      %p177 = scmp.eq.s32.totalorder %s176, 0
      %s179 = sadd.s32 %s178, 1
      %s180 = scalar_select %p177, %s178, %s179
      %p183 = pneg %p177
      %p184 = scmp.eq.s32.totalorder %s22, 1
      %p185 = por %p183, %p184
      %p186 = scmp.ne.s32.totalorder %s178, %s181
      %p187 = scmp.eq.s32.totalorder %s22, 0
      %p188 = por %p186, %p187
      %p189 = scmp.ne.s32.totalorder %s178, %s181
      %p190 = scmp.eq.s32.totalorder %s27, 1
      %p191 = por %p189, %p190
      %p192 = scmp.ne.s32.totalorder %s181, %s182
      %p193 = scmp.eq.s32.totalorder %s27, 0
      %p194 = por %p192, %p193
      %p195 = scmp.ne.s32.totalorder %s181, %s182
      %p196 = scmp.eq.s32.totalorder %s28, 1
      %p197 = por %p195, %p196
      %p199 = scmp.ne.s32.totalorder %s182, %s198
      %p200 = scmp.eq.s32.totalorder %s28, 0
      %p201 = por %p199, %p200
      %s202 = ssub.s32 %s22, %s29
      %p203 = scmp.eq.s32.totalorder %s202, 0
      %s205 = sadd.s32 %s204, 1
      %s206 = scalar_select %p203, %s204, %s205
      %p209 = pneg %p203
      %p210 = scmp.eq.s32.totalorder %s22, 1
      %p211 = por %p209, %p210
      %p212 = scmp.ne.s32.totalorder %s204, %s207
      %p213 = scmp.eq.s32.totalorder %s22, 0
      %p214 = por %p212, %p213
      %p215 = scmp.ne.s32.totalorder %s204, %s207
      %p216 = scmp.eq.s32.totalorder %s27, 1
      %p217 = por %p215, %p216
      %p218 = scmp.ne.s32.totalorder %s207, %s208
      %p219 = scmp.eq.s32.totalorder %s27, 0
      %p220 = por %p218, %p219
      %p221 = scmp.ne.s32.totalorder %s207, %s208
      %p222 = scmp.eq.s32.totalorder %s28, 1
      %p223 = por %p221, %p222
      %p225 = scmp.ne.s32.totalorder %s208, %s224
      %p226 = scmp.eq.s32.totalorder %s28, 0
      %p227 = por %p225, %p226
      %p228 = scmp.le.s32.totalorder 1, %s22
      %p229 = scmp.lt.s32.totalorder %s22, 3
      %p230 = pnand %p228, %p229
      %p231 = pneg %p230
      // Predicated region
      $region9: #{tpu_custom_call.1} parent=5 // pred_check
        _
      $region10: #{tpu_custom_call.1} parent=5 // pred_check_branch
        %233 = sbr.rel (%p230) target = $region12
      $region11: #{tpu_custom_call.1} parent=5 // pred_region
        %s234 = ssub.s32 %s22, 1
        // Predicated region
        $region13: #{tpu_custom_call.1} parent=11 // pred_check
          %p235 = pneg %p43
        $region14: #{tpu_custom_call.1} parent=11 // pred_check_branch
          %237 = sbr.rel (%p235) target = $region16
        $region15: #{tpu_custom_call.1} parent=11 // pred_region
          %s239 = ssub.s32 1024, 1024
          %240 = vsyncadd [#allocation4], %s239
          %s241 = sshll.u32 [#allocation3], 4
          %s242 = int_to_ptr.vmem [resolvable:$true] %s241
          %247 = dma.hbm_to_vmem [thread:$0]  %s0, 1024, %s242, [#allocation4], 128, 128, 8
        $region16: #{tpu_custom_call.1} parent=11 // pred_fallthru
          _
        // Predicated region
        $region17: #{tpu_custom_call.1} parent=11 // pred_check
          %p248 = pneg %p64
        $region18: #{tpu_custom_call.1} parent=11 // pred_check_branch
          %250 = sbr.rel (%p248) target = $region20
        $region19: #{tpu_custom_call.1} parent=11 // pred_region
          %s252 = ssub.s32 128, 128
          %253 = vsyncadd [#allocation7], %s252
          %s255 = sshll.u32 [#allocation6], 4
          %s256 = int_to_ptr.vmem [resolvable:$true] %s255
          %258 = dma.hbm_to_vmem [thread:$0]  %s1, 128, %s256, [#allocation7]
        $region20: #{tpu_custom_call.1} parent=11 // pred_fallthru
          _
      $region12: #{tpu_custom_call.1} parent=5 // pred_fallthru
        _
      %p259 = scmp.lt.s32.totalorder %s22, 2
      // Predicated region
      $region21: #{tpu_custom_call.1} parent=5 // pred_check
        %p260 = pneg %p259
      $region22: #{tpu_custom_call.1} parent=5 // pred_check_branch
        %262 = sbr.rel (%p260) target = $region24
      $region23: #{tpu_custom_call.1} parent=5 // pred_region
        // Predicated region
        $region25: #{tpu_custom_call.1} parent=23 // pred_check
          %p263 = pneg %p84
        $region26: #{tpu_custom_call.1} parent=23 // pred_check_branch
          %265 = sbr.rel (%p263) target = $region28
        $region27: #{tpu_custom_call.1} parent=23 // pred_region
          %s266 = sand.u32 %s22, 1
          %s267 = scalar_lea.sflag [#allocation4], %s266
          %s268 = sand.u32 %s74, 1
          %s269 = smul.addr %s268, 16
          %s270 = scalar_lea.vmem [#allocation8], %s269
          %s272 = ssub.s32 256, 256
          %273 = vsyncadd %s267, %s272
          %s274 = smul.addr %s22, 2
          %s275 = smul.addr %s274, 128
          %s276 = scalar_lea.hbm %s2, %s275
          %s277 = sshll.u32 %s270, 4
          %s278 = int_to_ptr.vmem [resolvable:$true] %s277
          %283 = dma.hbm_to_vmem [thread:$0]  %s276, 256, %s278, %s267, 128, 128, 8
        $region28: #{tpu_custom_call.1} parent=23 // pred_fallthru
          _
        // Predicated region
        $region29: #{tpu_custom_call.1} parent=23 // pred_check
          %p284 = pneg %p110
        $region30: #{tpu_custom_call.1} parent=23 // pred_check_branch
          %286 = sbr.rel (%p284) target = $region32
        $region31: #{tpu_custom_call.1} parent=23 // pred_region
          %s287 = sand.u32 %s22, 1
          %s288 = scalar_lea.sflag [#allocation4], %s287
          %s289 = sand.u32 %s100, 1
          %s290 = scalar_lea.vmem [#allocation9], %s289
          %s292 = ssub.s32 16, 16
          %293 = vsyncadd %s288, %s292
          %s294 = smul.addr %s22, 16
          %s295 = scalar_lea.hbm %s3, %s294
          %s297 = sshll.u32 %s290, 4
          %s298 = int_to_ptr.vmem [resolvable:$true] %s297
          %300 = dma.hbm_to_vmem [thread:$0]  %s295, 16, %s298, %s288
        $region32: #{tpu_custom_call.1} parent=23 // pred_fallthru
          _
        // Predicated region
        $region33: #{tpu_custom_call.1} parent=23 // pred_check
          %p301 = pneg %p136
        $region34: #{tpu_custom_call.1} parent=23 // pred_check_branch
          %303 = sbr.rel (%p301) target = $region36
        $region35: #{tpu_custom_call.1} parent=23 // pred_region
          %s304 = sand.u32 %s22, 1
          %s305 = scalar_lea.sflag [#allocation4], %s304
          %s306 = sand.u32 %s126, 1
          %s307 = smul.addr %s306, 32
          %s308 = scalar_lea.vmem [#allocation10], %s307
          %s310 = ssub.s32 512, 512
          %311 = vsyncadd %s305, %s310
          %s312 = smul.addr %s22, 4
          %s313 = smul.addr %s312, 128
          %s314 = scalar_lea.hbm %s4, %s313
          %s315 = sshll.u32 %s308, 4
          %s316 = int_to_ptr.vmem [resolvable:$true] %s315
          %321 = dma.hbm_to_vmem [thread:$0]  %s314, 512, %s316, %s305, 128, 128, 8
        $region36: #{tpu_custom_call.1} parent=23 // pred_fallthru
          _
        // Predicated region
        $region37: #{tpu_custom_call.1} parent=23 // pred_check
          %p322 = pneg %p162
        $region38: #{tpu_custom_call.1} parent=23 // pred_check_branch
          %324 = sbr.rel (%p322) target = $region40
        $region39: #{tpu_custom_call.1} parent=23 // pred_region
          %s325 = sand.u32 %s22, 1
          %s326 = scalar_lea.sflag [#allocation4], %s325
          %s327 = sand.u32 %s152, 1
          %s328 = scalar_lea.vmem [#allocation11], %s327
          %s330 = ssub.s32 16, 16
          %331 = vsyncadd %s326, %s330
          %s332 = smul.addr %s22, 16
          %s333 = scalar_lea.hbm %s5, %s332
          %s335 = sshll.u32 %s328, 4
          %s336 = int_to_ptr.vmem [resolvable:$true] %s335
          %338 = dma.hbm_to_vmem [thread:$0]  %s333, 16, %s336, %s326
        $region40: #{tpu_custom_call.1} parent=23 // pred_fallthru
          _
      $region24: #{tpu_custom_call.1} parent=5 // pred_fallthru
        _
      %p339 = scmp.le.s32.totalorder 1, %s22
      %p340 = scmp.lt.s32.totalorder %s22, 3
      %p341 = pnand %p339, %p340
      %p342 = pneg %p341
      // Predicated region
      $region41: #{tpu_custom_call.1} parent=5 // pred_check
        _
      $region42: #{tpu_custom_call.1} parent=5 // pred_check_branch
        %344 = sbr.rel (%p341) target = $region44
      $region43: #{tpu_custom_call.1} parent=5 // pred_region
        %s345 = ssub.s32 %s22, 1
        // Predicated region
        $region45: #{tpu_custom_call.1} parent=43 // pred_check
          %p346 = pneg %p43
        $region46: #{tpu_custom_call.1} parent=43 // pred_check_branch
          %348 = sbr.rel (%p346) target = $region48
        $region47: #{tpu_custom_call.1} parent=43 // pred_region
          %349 = dma.done [#allocation4], 1024
        $region48: #{tpu_custom_call.1} parent=43 // pred_fallthru
          _
        // Predicated region
        $region49: #{tpu_custom_call.1} parent=43 // pred_check
          %p350 = pneg %p64
        $region50: #{tpu_custom_call.1} parent=43 // pred_check_branch
          %352 = sbr.rel (%p350) target = $region52
        $region51: #{tpu_custom_call.1} parent=43 // pred_region
          %353 = dma.done [#allocation7], 128
        $region52: #{tpu_custom_call.1} parent=43 // pred_fallthru
          _
        %s354 = sand.u32 %s27, 1
        %s355 = scalar_lea.sflag [#allocation4], %s354
        %s356 = sand.u32 %s77, 1
        %s357 = smul.addr %s356, 16
        %s358 = scalar_lea.vmem [#allocation8], %s357
        // Predicated region
        $region53: #{tpu_custom_call.1} parent=43 // pred_check
          %p359 = pneg %p90
        $region54: #{tpu_custom_call.1} parent=43 // pred_check_branch
          %361 = sbr.rel (%p359) target = $region56
        $region55: #{tpu_custom_call.1} parent=43 // pred_region
          %362 = dma.done %s355, 256
        $region56: #{tpu_custom_call.1} parent=43 // pred_fallthru
          _
        %s363 = sand.u32 %s27, 1
        %s364 = scalar_lea.sflag [#allocation4], %s363
        %s365 = sand.u32 %s103, 1
        %s366 = scalar_lea.vmem [#allocation9], %s365
        // Predicated region
        $region57: #{tpu_custom_call.1} parent=43 // pred_check
          %p367 = pneg %p116
        $region58: #{tpu_custom_call.1} parent=43 // pred_check_branch
          %369 = sbr.rel (%p367) target = $region60
        $region59: #{tpu_custom_call.1} parent=43 // pred_region
          %370 = dma.done %s364, 16
        $region60: #{tpu_custom_call.1} parent=43 // pred_fallthru
          _
        %s371 = sand.u32 %s27, 1
        %s372 = scalar_lea.sflag [#allocation4], %s371
        %s373 = sand.u32 %s129, 1
        %s374 = smul.addr %s373, 32
        %s375 = scalar_lea.vmem [#allocation10], %s374
        // Predicated region
        $region61: #{tpu_custom_call.1} parent=43 // pred_check
          %p376 = pneg %p142
        $region62: #{tpu_custom_call.1} parent=43 // pred_check_branch
          %378 = sbr.rel (%p376) target = $region64
        $region63: #{tpu_custom_call.1} parent=43 // pred_region
          %379 = dma.done %s372, 512
        $region64: #{tpu_custom_call.1} parent=43 // pred_fallthru
          _
        %s380 = sand.u32 %s27, 1
        %s381 = scalar_lea.sflag [#allocation4], %s380
        %s382 = sand.u32 %s155, 1
        %s383 = scalar_lea.vmem [#allocation11], %s382
        // Predicated region
        $region65: #{tpu_custom_call.1} parent=43 // pred_check
          %p384 = pneg %p168
        $region66: #{tpu_custom_call.1} parent=43 // pred_check_branch
          %386 = sbr.rel (%p384) target = $region68
        $region67: #{tpu_custom_call.1} parent=43 // pred_region
          %387 = dma.done %s381, 16
        $region68: #{tpu_custom_call.1} parent=43 // pred_fallthru
          _
        %p388 = pneg %p43
        %p389 = pneg %p40
        %p390 = pneg %p64
        %p391 = pneg %p61
        %s392 = sand.u32 %s27, 1
        %s393 = scalar_lea.sflag [#allocation4], %s392
        %s394 = sand.u32 %s77, 1
        %s395 = smul.addr %s394, 16
        %s396 = scalar_lea.vmem [#allocation8], %s395
        %p397 = pneg %p90
        %p398 = pneg %p87
        %s399 = sand.u32 %s27, 1
        %s400 = scalar_lea.sflag [#allocation4], %s399
        %s401 = sand.u32 %s103, 1
        %s402 = scalar_lea.vmem [#allocation9], %s401
        %p403 = pneg %p116
        %p404 = pneg %p113
        %s405 = sand.u32 %s27, 1
        %s406 = scalar_lea.sflag [#allocation4], %s405
        %s407 = sand.u32 %s129, 1
        %s408 = smul.addr %s407, 32
        %s409 = scalar_lea.vmem [#allocation10], %s408
        %p410 = pneg %p142
        %p411 = pneg %p139
        %s412 = sand.u32 %s27, 1
        %s413 = scalar_lea.sflag [#allocation4], %s412
        %s414 = sand.u32 %s155, 1
        %s415 = scalar_lea.vmem [#allocation11], %s414
        %p416 = pneg %p168
        %p417 = pneg %p165
        %p418 = pneg %p194
        %p419 = pneg %p191
        %s420 = sand.u32 %s181, 1
        %s421 = scalar_lea.sflag [#allocation5], %s420
        %s422 = sand.u32 %s181, 1
        %s423 = smul.addr %s422, 64
        %s424 = scalar_lea.vmem [#allocation12], %s423
        %p425 = pneg %p220
        %p426 = pneg %p217
        %s427 = sand.u32 %s207, 1
        %s428 = scalar_lea.sflag [#allocation14], %s427
        %s429 = sand.u32 %s207, 1
        %s430 = smul.addr %s429, 8
        %s431 = scalar_lea.vmem [#allocation13], %s430
        %v432 = vld [vmem:[#allocation3] sm:$0xff]
        %v433 = vld [vmem:[#allocation3 + $0x8] sm:$0xff]
        %v434 = vld [vmem:[#allocation3 + $0x10] sm:$0xff]
        %v435 = vld [vmem:[#allocation3 + $0x18] sm:$0xff]
        %v436 = vld [vmem:[#allocation3 + $0x20] sm:$0xff]
        %v437 = vld [vmem:[#allocation3 + $0x28] sm:$0xff]
        %v438 = vld [vmem:[#allocation3 + $0x30] sm:$0xff]
        %v439 = vld [vmem:[#allocation3 + $0x38] sm:$0xff]
        %v440 = vld [vmem:[%s358] sm:$0xff]
        %v441 = vld [vmem:[%s358 + $0x8] sm:$0xff]
        %v442 = vld [vmem:[%s366] sm:$0x1]
        %v444 = vlaneseq
        %v445 = vshrl.u32 %v444, 7
        %v446 = vsub.s32 0, %v445
        %v447 = vrot.slane %v442, %v446
        %vm449 = vcmask 130048
        %v451 = vsel %vm449, %v432, 0
        %v454 = vsel %vm449, %v433, 0
        %v457 = vsel %vm449, %v434, 0
        %v460 = vsel %vm449, %v435, 0
        %v463 = vsel %vm449, %v436, 0
        %v466 = vsel %vm449, %v437, 0
        %v469 = vsel %vm449, %v438, 0
        %v472 = vsel %vm449, %v439, 0
        %474 = vmatprep.subr.mxu0 0.0
        %475 = vmatpush1.msra.mxu0 %v440
        %476 = vmatprep.subr.mxu0 0.0
        %477 = vmatpush1.msra.mxu0 %v441
        %478 = vmatprep.subr.mxu0 0.0
        %479 = vmatpush1.msra.mxu0 0.0
        %480 = vmatprep.subr.mxu0 0.0
        %481 = vmatpush1.msra.mxu0 0.0
        %482 = vmatprep.subr.mxu0 0.0
        %483 = vmatpush1.msra.mxu0 0.0
        %484 = vmatprep.subr.mxu0 0.0
        %485 = vmatpush1.msra.mxu0 0.0
        %486 = vmatprep.subr.mxu0 0.0
        %487 = vmatpush1.msra.mxu0 0.0
        %488 = vmatprep.subr.mxu0 0.0
        %489 = vmatpush1.msra.mxu0 0.0
        %490 = vmatprep.subr.mxu0 0.0
        %491 = vmatpush1.msra.mxu0 0.0
        %492 = vmatprep.subr.mxu0 0.0
        %493 = vmatpush1.msra.mxu0 0.0
        %494 = vmatprep.subr.mxu0 0.0
        %495 = vmatpush1.msra.mxu0 0.0
        %496 = vmatprep.subr.mxu0 0.0
        %497 = vmatpush1.msra.mxu0 0.0
        %498 = vmatprep.subr.mxu0 0.0
        %499 = vmatpush1.msra.mxu0 0.0
        %500 = vmatprep.subr.mxu0 0.0
        %501 = vmatpush1.msra.mxu0 0.0
        %502 = vmatprep.subr.mxu0 0.0
        %503 = vmatpush1.msra.mxu0 0.0
        %504 = vmatprep.subr.mxu0 0.0
        %505 = vmatpush1.msra.mxu0 0.0
        %506 = vmatprep.subr.mxu0 0.0
        %507 = vmatpush1.msra.mxu0 0.0
        %508 = vmatprep.subr.mxu0 0.0
        %509 = vmatpush1.msra.mxu0 0.0
        %510 = vmatprep.subr.mxu0 0.0
        %511 = vmatpush1.msra.mxu0 0.0
        %512 = vmatprep.subr.mxu0 0.0
        %513 = vmatpush1.msra.mxu0 0.0
        %514 = vmatprep.subr.mxu0 0.0
        %515 = vmatpush1.msra.mxu0 0.0
        %516 = vmatprep.subr.mxu0 0.0
        %517 = vmatpush1.msra.mxu0 0.0
        %518 = vmatprep.subr.mxu0 0.0
        %519 = vmatpush1.msra.mxu0 0.0
        %520 = vmatprep.subr.mxu0 0.0
        %521 = vmatpush1.msra.mxu0 0.0
        %522 = vmatprep.subr.mxu0 0.0
        %523 = vmatpush1.msra.mxu0 0.0
        %524 = vmatprep.subr.mxu0 0.0
        %525 = vmatpush1.msra.mxu0 0.0
        %526 = vmatprep.subr.mxu0 0.0
        %527 = vmatpush1.msra.mxu0 0.0
        %528 = vmatprep.subr.mxu0 0.0
        %529 = vmatpush1.msra.mxu0 0.0
        %530 = vmatprep.subr.mxu0 0.0
        %531 = vmatpush1.msra.mxu0 0.0
        %532 = vmatprep.subr.mxu0 0.0
        %533 = vmatpush1.msra.mxu0 0.0
        %534 = vmatprep.subr.mxu0 0.0
        %535 = vmatpush1.msra.mxu0 0.0
        %536 = vmatprep.subr.mxu0 0.0
        %537 = vmatpush1.msra.mxu0 0.0
        %538 = vmatprep.mubr.f32.mxu0 0.0
        %539 = vmatmul.mubr.f32.gmra.mrb[0].mxu0 %v451
        %v540 = vpop.f32.mrb[0].mxu0
        %v541 = vadd.f32 %v447, %v540
        %v542 = vpop.f32.mrb[0].mxu0
        %543 = vmatprep.mubr.f32.mxu0 0.0
        %544 = vmatmul.mubr.f32.gmra.mrb[0].mxu0 %v454
        %v545 = vpop.f32.mrb[0].mxu0
        %v546 = vadd.f32 %v447, %v545
        %v547 = vpop.f32.mrb[0].mxu0
        %548 = vmatprep.mubr.f32.mxu0 0.0
        %549 = vmatmul.mubr.f32.gmra.mrb[0].mxu0 %v457
        %v550 = vpop.f32.mrb[0].mxu0
        %v551 = vadd.f32 %v447, %v550
        %v552 = vpop.f32.mrb[0].mxu0
        %553 = vmatprep.mubr.f32.mxu0 0.0
        %554 = vmatmul.mubr.f32.gmra.mrb[0].mxu0 %v460
        %v555 = vpop.f32.mrb[0].mxu0
        %v556 = vadd.f32 %v447, %v555
        %v557 = vpop.f32.mrb[0].mxu0
        %558 = vmatprep.mubr.f32.mxu0 0.0
        %559 = vmatmul.mubr.f32.gmra.mrb[0].mxu0 %v463
        %v560 = vpop.f32.mrb[0].mxu0
        %v561 = vadd.f32 %v447, %v560
        %v562 = vpop.f32.mrb[0].mxu0
        %563 = vmatprep.mubr.f32.mxu0 0.0
        %564 = vmatmul.mubr.f32.gmra.mrb[0].mxu0 %v466
        %v565 = vpop.f32.mrb[0].mxu0
        %v566 = vadd.f32 %v447, %v565
        %v567 = vpop.f32.mrb[0].mxu0
        %568 = vmatprep.mubr.f32.mxu0 0.0
        %569 = vmatmul.mubr.f32.gmra.mrb[0].mxu0 %v469
        %v570 = vpop.f32.mrb[0].mxu0
        %v571 = vadd.f32 %v447, %v570
        %v572 = vpop.f32.mrb[0].mxu0
        %573 = vmatprep.mubr.f32.mxu0 0.0
        %574 = vmatmul.mubr.f32.gmra.mrb[0].mxu0 %v472
        %v575 = vpop.f32.mrb[0].mxu0
        %v576 = vadd.f32 %v447, %v575
        %v577 = vpop.f32.mrb[0].mxu0
        %578 = vdwg.mxu0
        %vm579 = vcmask 785408
        %580 = vst.msk [vmem:[#allocation2] sm:$0xff] %vm579, %v541
        %581 = vst.msk [vmem:[#allocation2 + $0x8] sm:$0xff] %vm579, %v546
        %582 = vst.msk [vmem:[#allocation2 + $0x10] sm:$0xff] %vm579, %v551
        %583 = vst.msk [vmem:[#allocation2 + $0x18] sm:$0xff] %vm579, %v556
        %584 = vst.msk [vmem:[#allocation2 + $0x20] sm:$0xff] %vm579, %v561
        %585 = vst.msk [vmem:[#allocation2 + $0x28] sm:$0xff] %vm579, %v566
        %586 = vst.msk [vmem:[#allocation2 + $0x30] sm:$0xff] %vm579, %v571
        %587 = vst.msk [vmem:[#allocation2 + $0x38] sm:$0xff] %vm579, %v576
        %v588 = vld [vmem:[#allocation6] sm:$0xff]
        %v589 = vld [vmem:[%s375] sm:$0xff]
        %v590 = vld [vmem:[%s375 + $0x8] sm:$0xff]
        %v591 = vld [vmem:[%s375 + $0x10] sm:$0xff]
        %v592 = vld [vmem:[%s375 + $0x18] sm:$0xff]
        %v593 = vld [vmem:[%s383] sm:$0x1]
        %p594 = scmp.eq.s32.totalorder %s27, 0
        %s595 = scalar_select %p594, 0, 7
        %s596 = smul.u32 %s595, 8
        %s597 = scalar_lea.vmem [#allocation2], %s596
        %v598 = vld [vmem:[%s597] sm:$0xff]
        %v600 = vlaneseq
        %v601 = vshrl.u32 %v600, 7
        %v602 = vsub.s32 0, %v601
        %v603 = vrot.slane %v593, %v602
        %vm605 = vcmask 261120
        %v607 = vsel %vm605, 0.0, 0
        %609 = vmatprep.subr.mxu0 0.0
        %610 = vmatpush1.msra.mxu0 %v589
        %611 = vmatprep.subr.mxu0 0.0
        %612 = vmatpush1.msra.mxu0 %v590
        %613 = vmatprep.subr.mxu0 0.0
        %614 = vmatpush1.msra.mxu0 %v591
        %615 = vmatprep.subr.mxu0 0.0
        %616 = vmatpush1.msra.mxu0 %v592
        %617 = vmatprep.subr.mxu0 0.0
        %618 = vmatpush1.msra.mxu0 0.0
        %619 = vmatprep.subr.mxu0 0.0
        %620 = vmatpush1.msra.mxu0 0.0
        %621 = vmatprep.subr.mxu0 0.0
        %622 = vmatpush1.msra.mxu0 0.0
        %623 = vmatprep.subr.mxu0 0.0
        %624 = vmatpush1.msra.mxu0 0.0
        %625 = vmatprep.subr.mxu0 0.0
        %626 = vmatpush1.msra.mxu0 0.0
        %627 = vmatprep.subr.mxu0 0.0
        %628 = vmatpush1.msra.mxu0 0.0
        %629 = vmatprep.subr.mxu0 0.0
        %630 = vmatpush1.msra.mxu0 0.0
        %631 = vmatprep.subr.mxu0 0.0
        %632 = vmatpush1.msra.mxu0 0.0
        %633 = vmatprep.subr.mxu0 0.0
        %634 = vmatpush1.msra.mxu0 0.0
        %635 = vmatprep.subr.mxu0 0.0
        %636 = vmatpush1.msra.mxu0 0.0
        %637 = vmatprep.subr.mxu0 0.0
        %638 = vmatpush1.msra.mxu0 0.0
        %639 = vmatprep.subr.mxu0 0.0
        %640 = vmatpush1.msra.mxu0 0.0
        %641 = vmatprep.subr.mxu0 0.0
        %642 = vmatpush1.msra.mxu0 0.0
        %643 = vmatprep.subr.mxu0 0.0
        %644 = vmatpush1.msra.mxu0 0.0
        %645 = vmatprep.subr.mxu0 0.0
        %646 = vmatpush1.msra.mxu0 0.0
        %647 = vmatprep.subr.mxu0 0.0
        %648 = vmatpush1.msra.mxu0 0.0
        %649 = vmatprep.subr.mxu0 0.0
        %650 = vmatpush1.msra.mxu0 0.0
        %651 = vmatprep.subr.mxu0 0.0
        %652 = vmatpush1.msra.mxu0 0.0
        %653 = vmatprep.subr.mxu0 0.0
        %654 = vmatpush1.msra.mxu0 0.0
        %655 = vmatprep.subr.mxu0 0.0
        %656 = vmatpush1.msra.mxu0 0.0
        %657 = vmatprep.subr.mxu0 0.0
        %658 = vmatpush1.msra.mxu0 0.0
        %659 = vmatprep.subr.mxu0 0.0
        %660 = vmatpush1.msra.mxu0 0.0
        %661 = vmatprep.subr.mxu0 0.0
        %662 = vmatpush1.msra.mxu0 0.0
        %663 = vmatprep.subr.mxu0 0.0
        %664 = vmatpush1.msra.mxu0 0.0
        %665 = vmatprep.subr.mxu0 0.0
        %666 = vmatpush1.msra.mxu0 0.0
        %667 = vmatprep.subr.mxu0 0.0
        %668 = vmatpush1.msra.mxu0 0.0
        %669 = vmatprep.subr.mxu0 0.0
        %670 = vmatpush1.msra.mxu0 0.0
        %671 = vmatprep.subr.mxu0 0.0
        %672 = vmatpush1.msra.mxu0 0.0
        %673 = vmatprep.mubr.f32.mxu0 0.0
        %674 = vmatmul.mubr.f32.gmra.mrb[0].mxu0 %v607
        %v675 = vpop.f32.mrb[0].mxu0
        %v676 = vadd.f32 %v603, %v675
        %v677 = vpop.f32.mrb[0].mxu0
        %678 = vdwg.mxu0
        %v679 = vadd.f32 %v598, %v676
        %v680 = vxor.u32 %v679, 2147483648
        %v681 = vmul.f32 %v680, 1.442695
        %v682 = vpow.pop %v681
        %v683 = vadd.f32 %v682, 1.0
        %v684 = vrcp.pop %v683
        %v685 = vmul.f32 1.0, %v684
        %687 = vrot.lane.b32.xlu0 %v676, 64
        %v688 = vpop.permute.xlu0 %687
        %v690 = vmul.f32 %v685, %v688
        %692 = vrot.lane.b32.xlu0 %v690, 64
        %v693 = vpop.permute.xlu0 %692
        %v695 = vadd.f32 %v598, %v693
        %v696 = vtanh.pop %v695
        %v697 = vsub.f32 1.0, %v685
        %699 = vrot.lane.b32.xlu0 %v696, 96
        %v700 = vpop.permute.xlu0 %699
        %v702 = vmul.f32 %v697, %v700
        %v703 = vmul.f32 %v685, 0.0
        %v704 = vadd.f32 %v702, %v703
        %v705 = vstv %s595
        %vm706 = vcmp.gt.s32.totalorder %v588, %v705
        %v707 = vsel %vm706, 1, 0
        %708 = vset.pattern.permute.xlu0 0
        %709 = vperm.xlu0 %708, %v707
        %v710 = vpop.permute.xlu0 %709
        %vm711 = vcmp.eq.s32.totalorder %v710, 1
        %v712 = vsel %vm711, %v704, 0.0
        %714 = vrot.lane.b32.xlu0 %v712, 96
        %v715 = vpop.permute.xlu0 %714
        %s717 = scalar_lea.vmem %s424, %s596 [#allocation12]
        %718 = vst.msk [vmem:[%s717] sm:$0xff] %vm605, %v715
        %s719 = scalar_select %p594, 1, 6
        %s720 = smul.u32 %s719, 8
        %s721 = scalar_lea.vmem [#allocation2], %s720
        %v722 = vld [vmem:[%s721] sm:$0xff]
        %v723 = vsel %vm605, %v715, 0
        %725 = vmatprep.subr.mxu0 0.0
        %726 = vmatpush1.msra.mxu0 %v589
        %727 = vmatprep.subr.mxu0 0.0
        %728 = vmatpush1.msra.mxu0 %v590
        %729 = vmatprep.subr.mxu0 0.0
        %730 = vmatpush1.msra.mxu0 %v591
        %731 = vmatprep.subr.mxu0 0.0
        %732 = vmatpush1.msra.mxu0 %v592
        %733 = vmatprep.subr.mxu0 0.0
        %734 = vmatpush1.msra.mxu0 0.0
        %735 = vmatprep.subr.mxu0 0.0
        %736 = vmatpush1.msra.mxu0 0.0
        %737 = vmatprep.subr.mxu0 0.0
        %738 = vmatpush1.msra.mxu0 0.0
        %739 = vmatprep.subr.mxu0 0.0
        %740 = vmatpush1.msra.mxu0 0.0
        %741 = vmatprep.subr.mxu0 0.0
        %742 = vmatpush1.msra.mxu0 0.0
        %743 = vmatprep.subr.mxu0 0.0
        %744 = vmatpush1.msra.mxu0 0.0
        %745 = vmatprep.subr.mxu0 0.0
        %746 = vmatpush1.msra.mxu0 0.0
        %747 = vmatprep.subr.mxu0 0.0
        %748 = vmatpush1.msra.mxu0 0.0
        %749 = vmatprep.subr.mxu0 0.0
        %750 = vmatpush1.msra.mxu0 0.0
        %751 = vmatprep.subr.mxu0 0.0
        %752 = vmatpush1.msra.mxu0 0.0
        %753 = vmatprep.subr.mxu0 0.0
        %754 = vmatpush1.msra.mxu0 0.0
        %755 = vmatprep.subr.mxu0 0.0
        %756 = vmatpush1.msra.mxu0 0.0
        %757 = vmatprep.subr.mxu0 0.0
        %758 = vmatpush1.msra.mxu0 0.0
        %759 = vmatprep.subr.mxu0 0.0
        %760 = vmatpush1.msra.mxu0 0.0
        %761 = vmatprep.subr.mxu0 0.0
        %762 = vmatpush1.msra.mxu0 0.0
        %763 = vmatprep.subr.mxu0 0.0
        %764 = vmatpush1.msra.mxu0 0.0
        %765 = vmatprep.subr.mxu0 0.0
        %766 = vmatpush1.msra.mxu0 0.0
        %767 = vmatprep.subr.mxu0 0.0
        %768 = vmatpush1.msra.mxu0 0.0
        %769 = vmatprep.subr.mxu0 0.0
        %770 = vmatpush1.msra.mxu0 0.0
        %771 = vmatprep.subr.mxu0 0.0
        %772 = vmatpush1.msra.mxu0 0.0
        %773 = vmatprep.subr.mxu0 0.0
        %774 = vmatpush1.msra.mxu0 0.0
        %775 = vmatprep.subr.mxu0 0.0
        %776 = vmatpush1.msra.mxu0 0.0
        %777 = vmatprep.subr.mxu0 0.0
        %778 = vmatpush1.msra.mxu0 0.0
        %779 = vmatprep.subr.mxu0 0.0
        %780 = vmatpush1.msra.mxu0 0.0
        %781 = vmatprep.subr.mxu0 0.0
        %782 = vmatpush1.msra.mxu0 0.0
        %783 = vmatprep.subr.mxu0 0.0
        %784 = vmatpush1.msra.mxu0 0.0
        %785 = vmatprep.subr.mxu0 0.0
        %786 = vmatpush1.msra.mxu0 0.0
        %787 = vmatprep.subr.mxu0 0.0
        %788 = vmatpush1.msra.mxu0 0.0
        %789 = vmatprep.mubr.f32.mxu0 0.0
        %790 = vmatmul.mubr.f32.gmra.mrb[0].mxu0 %v723
        %v791 = vpop.f32.mrb[0].mxu0
        %v792 = vadd.f32 %v603, %v791
        %v793 = vpop.f32.mrb[0].mxu0
        %794 = vdwg.mxu0
        %v795 = vadd.f32 %v722, %v792
        %v796 = vxor.u32 %v795, 2147483648
        %v797 = vmul.f32 %v796, 1.442695
        %v798 = vpow.pop %v797
        %v799 = vadd.f32 %v798, 1.0
        %v800 = vrcp.pop %v799
        %v801 = vmul.f32 1.0, %v800
        %803 = vrot.lane.b32.xlu0 %v792, 64
        %v804 = vpop.permute.xlu0 %803
        %v806 = vmul.f32 %v801, %v804
        %808 = vrot.lane.b32.xlu0 %v806, 64
        %v809 = vpop.permute.xlu0 %808
        %v811 = vadd.f32 %v722, %v809
        %v812 = vtanh.pop %v811
        %v813 = vsub.f32 1.0, %v801
        %815 = vrot.lane.b32.xlu0 %v812, 96
        %v816 = vpop.permute.xlu0 %815
        %v818 = vmul.f32 %v813, %v816
        %v819 = vmul.f32 %v801, %v712
        %v820 = vadd.f32 %v818, %v819
        %v821 = vstv %s719
        %vm822 = vcmp.gt.s32.totalorder %v588, %v821
        %v823 = vsel %vm822, 1, 0
        %824 = vset.pattern.permute.xlu0 0
        %825 = vperm.xlu0 %824, %v823
        %v826 = vpop.permute.xlu0 %825
        %vm827 = vcmp.eq.s32.totalorder %v826, 1
        %v828 = vsel %vm827, %v820, %v712
        %830 = vrot.lane.b32.xlu0 %v828, 96
        %v831 = vpop.permute.xlu0 %830
        %s833 = scalar_lea.vmem %s424, %s720 [#allocation12]
        %834 = vst.msk [vmem:[%s833] sm:$0xff] %vm605, %v831
        %s835 = scalar_select %p594, 2, 5
        %s836 = smul.u32 %s835, 8
        %s837 = scalar_lea.vmem [#allocation2], %s836
        %v838 = vld [vmem:[%s837] sm:$0xff]
        %v839 = vsel %vm605, %v831, 0
        %841 = vmatprep.subr.mxu0 0.0
        %842 = vmatpush1.msra.mxu0 %v589
        %843 = vmatprep.subr.mxu0 0.0
        %844 = vmatpush1.msra.mxu0 %v590
        %845 = vmatprep.subr.mxu0 0.0
        %846 = vmatpush1.msra.mxu0 %v591
        %847 = vmatprep.subr.mxu0 0.0
        %848 = vmatpush1.msra.mxu0 %v592
        %849 = vmatprep.subr.mxu0 0.0
        %850 = vmatpush1.msra.mxu0 0.0
        %851 = vmatprep.subr.mxu0 0.0
        %852 = vmatpush1.msra.mxu0 0.0
        %853 = vmatprep.subr.mxu0 0.0
        %854 = vmatpush1.msra.mxu0 0.0
        %855 = vmatprep.subr.mxu0 0.0
        %856 = vmatpush1.msra.mxu0 0.0
        %857 = vmatprep.subr.mxu0 0.0
        %858 = vmatpush1.msra.mxu0 0.0
        %859 = vmatprep.subr.mxu0 0.0
        %860 = vmatpush1.msra.mxu0 0.0
        %861 = vmatprep.subr.mxu0 0.0
        %862 = vmatpush1.msra.mxu0 0.0
        %863 = vmatprep.subr.mxu0 0.0
        %864 = vmatpush1.msra.mxu0 0.0
        %865 = vmatprep.subr.mxu0 0.0
        %866 = vmatpush1.msra.mxu0 0.0
        %867 = vmatprep.subr.mxu0 0.0
        %868 = vmatpush1.msra.mxu0 0.0
        %869 = vmatprep.subr.mxu0 0.0
        %870 = vmatpush1.msra.mxu0 0.0
        %871 = vmatprep.subr.mxu0 0.0
        %872 = vmatpush1.msra.mxu0 0.0
        %873 = vmatprep.subr.mxu0 0.0
        %874 = vmatpush1.msra.mxu0 0.0
        %875 = vmatprep.subr.mxu0 0.0
        %876 = vmatpush1.msra.mxu0 0.0
        %877 = vmatprep.subr.mxu0 0.0
        %878 = vmatpush1.msra.mxu0 0.0
        %879 = vmatprep.subr.mxu0 0.0
        %880 = vmatpush1.msra.mxu0 0.0
        %881 = vmatprep.subr.mxu0 0.0
        %882 = vmatpush1.msra.mxu0 0.0
        %883 = vmatprep.subr.mxu0 0.0
        %884 = vmatpush1.msra.mxu0 0.0
        %885 = vmatprep.subr.mxu0 0.0
        %886 = vmatpush1.msra.mxu0 0.0
        %887 = vmatprep.subr.mxu0 0.0
        %888 = vmatpush1.msra.mxu0 0.0
        %889 = vmatprep.subr.mxu0 0.0
        %890 = vmatpush1.msra.mxu0 0.0
        %891 = vmatprep.subr.mxu0 0.0
        %892 = vmatpush1.msra.mxu0 0.0
        %893 = vmatprep.subr.mxu0 0.0
        %894 = vmatpush1.msra.mxu0 0.0
        %895 = vmatprep.subr.mxu0 0.0
        %896 = vmatpush1.msra.mxu0 0.0
        %897 = vmatprep.subr.mxu0 0.0
        %898 = vmatpush1.msra.mxu0 0.0
        %899 = vmatprep.subr.mxu0 0.0
        %900 = vmatpush1.msra.mxu0 0.0
        %901 = vmatprep.subr.mxu0 0.0
        %902 = vmatpush1.msra.mxu0 0.0
        %903 = vmatprep.subr.mxu0 0.0
        %904 = vmatpush1.msra.mxu0 0.0
        %905 = vmatprep.mubr.f32.mxu0 0.0
        %906 = vmatmul.mubr.f32.gmra.mrb[0].mxu0 %v839
        %v907 = vpop.f32.mrb[0].mxu0
        %v908 = vadd.f32 %v603, %v907
        %v909 = vpop.f32.mrb[0].mxu0
        %910 = vdwg.mxu0
        %v911 = vadd.f32 %v838, %v908
        %v912 = vxor.u32 %v911, 2147483648
        %v913 = vmul.f32 %v912, 1.442695
        %v914 = vpow.pop %v913
        %v915 = vadd.f32 %v914, 1.0
        %v916 = vrcp.pop %v915
        %v917 = vmul.f32 1.0, %v916
        %919 = vrot.lane.b32.xlu0 %v908, 64
        %v920 = vpop.permute.xlu0 %919
        %v922 = vmul.f32 %v917, %v920
        %924 = vrot.lane.b32.xlu0 %v922, 64
        %v925 = vpop.permute.xlu0 %924
        %v927 = vadd.f32 %v838, %v925
        %v928 = vtanh.pop %v927
        %v929 = vsub.f32 1.0, %v917
        %931 = vrot.lane.b32.xlu0 %v928, 96
        %v932 = vpop.permute.xlu0 %931
        %v934 = vmul.f32 %v929, %v932
        %v935 = vmul.f32 %v917, %v828
        %v936 = vadd.f32 %v934, %v935
        %v937 = vstv %s835
        %vm938 = vcmp.gt.s32.totalorder %v588, %v937
        %v939 = vsel %vm938, 1, 0
        %940 = vset.pattern.permute.xlu0 0
        %941 = vperm.xlu0 %940, %v939
        %v942 = vpop.permute.xlu0 %941
        %vm943 = vcmp.eq.s32.totalorder %v942, 1
        %v944 = vsel %vm943, %v936, %v828
        %946 = vrot.lane.b32.xlu0 %v944, 96
        %v947 = vpop.permute.xlu0 %946
        %s949 = scalar_lea.vmem %s424, %s836 [#allocation12]
        %950 = vst.msk [vmem:[%s949] sm:$0xff] %vm605, %v947
        %s951 = scalar_select %p594, 3, 4
        %s952 = smul.u32 %s951, 8
        %s953 = scalar_lea.vmem [#allocation2], %s952
        %v954 = vld [vmem:[%s953] sm:$0xff]
        %v955 = vsel %vm605, %v947, 0
        %957 = vmatprep.subr.mxu0 0.0
        %958 = vmatpush1.msra.mxu0 %v589
        %959 = vmatprep.subr.mxu0 0.0
        %960 = vmatpush1.msra.mxu0 %v590
        %961 = vmatprep.subr.mxu0 0.0
        %962 = vmatpush1.msra.mxu0 %v591
        %963 = vmatprep.subr.mxu0 0.0
        %964 = vmatpush1.msra.mxu0 %v592
        %965 = vmatprep.subr.mxu0 0.0
        %966 = vmatpush1.msra.mxu0 0.0
        %967 = vmatprep.subr.mxu0 0.0
        %968 = vmatpush1.msra.mxu0 0.0
        %969 = vmatprep.subr.mxu0 0.0
        %970 = vmatpush1.msra.mxu0 0.0
        %971 = vmatprep.subr.mxu0 0.0
        %972 = vmatpush1.msra.mxu0 0.0
        %973 = vmatprep.subr.mxu0 0.0
        %974 = vmatpush1.msra.mxu0 0.0
        %975 = vmatprep.subr.mxu0 0.0
        %976 = vmatpush1.msra.mxu0 0.0
        %977 = vmatprep.subr.mxu0 0.0
        %978 = vmatpush1.msra.mxu0 0.0
        %979 = vmatprep.subr.mxu0 0.0
        %980 = vmatpush1.msra.mxu0 0.0
        %981 = vmatprep.subr.mxu0 0.0
        %982 = vmatpush1.msra.mxu0 0.0
        %983 = vmatprep.subr.mxu0 0.0
        %984 = vmatpush1.msra.mxu0 0.0
        %985 = vmatprep.subr.mxu0 0.0
        %986 = vmatpush1.msra.mxu0 0.0
        %987 = vmatprep.subr.mxu0 0.0
        %988 = vmatpush1.msra.mxu0 0.0
        %989 = vmatprep.subr.mxu0 0.0
        %990 = vmatpush1.msra.mxu0 0.0
        %991 = vmatprep.subr.mxu0 0.0
        %992 = vmatpush1.msra.mxu0 0.0
        %993 = vmatprep.subr.mxu0 0.0
        %994 = vmatpush1.msra.mxu0 0.0
        %995 = vmatprep.subr.mxu0 0.0
        %996 = vmatpush1.msra.mxu0 0.0
        %997 = vmatprep.subr.mxu0 0.0
        %998 = vmatpush1.msra.mxu0 0.0
        %999 = vmatprep.subr.mxu0 0.0
        %1000 = vmatpush1.msra.mxu0 0.0
        %1001 = vmatprep.subr.mxu0 0.0
        %1002 = vmatpush1.msra.mxu0 0.0
        %1003 = vmatprep.subr.mxu0 0.0
        %1004 = vmatpush1.msra.mxu0 0.0
        %1005 = vmatprep.subr.mxu0 0.0
        %1006 = vmatpush1.msra.mxu0 0.0
        %1007 = vmatprep.subr.mxu0 0.0
        %1008 = vmatpush1.msra.mxu0 0.0
        %1009 = vmatprep.subr.mxu0 0.0
        %1010 = vmatpush1.msra.mxu0 0.0
        %1011 = vmatprep.subr.mxu0 0.0
        %1012 = vmatpush1.msra.mxu0 0.0
        %1013 = vmatprep.subr.mxu0 0.0
        %1014 = vmatpush1.msra.mxu0 0.0
        %1015 = vmatprep.subr.mxu0 0.0
        %1016 = vmatpush1.msra.mxu0 0.0
        %1017 = vmatprep.subr.mxu0 0.0
        %1018 = vmatpush1.msra.mxu0 0.0
        %1019 = vmatprep.subr.mxu0 0.0
        %1020 = vmatpush1.msra.mxu0 0.0
        %1021 = vmatprep.mubr.f32.mxu0 0.0
        %1022 = vmatmul.mubr.f32.gmra.mrb[0].mxu0 %v955
        %v1023 = vpop.f32.mrb[0].mxu0
        %v1024 = vadd.f32 %v603, %v1023
        %v1025 = vpop.f32.mrb[0].mxu0
        %1026 = vdwg.mxu0
        %v1027 = vadd.f32 %v954, %v1024
        %v1028 = vxor.u32 %v1027, 2147483648
        %v1029 = vmul.f32 %v1028, 1.442695
        %v1030 = vpow.pop %v1029
        %v1031 = vadd.f32 %v1030, 1.0
        %v1032 = vrcp.pop %v1031
        %v1033 = vmul.f32 1.0, %v1032
        %1035 = vrot.lane.b32.xlu0 %v1024, 64
        %v1036 = vpop.permute.xlu0 %1035
        %v1038 = vmul.f32 %v1033, %v1036
        %1040 = vrot.lane.b32.xlu0 %v1038, 64
        %v1041 = vpop.permute.xlu0 %1040
        %v1043 = vadd.f32 %v954, %v1041
        %v1044 = vtanh.pop %v1043
        %v1045 = vsub.f32 1.0, %v1033
        %1047 = vrot.lane.b32.xlu0 %v1044, 96
        %v1048 = vpop.permute.xlu0 %1047
        %v1050 = vmul.f32 %v1045, %v1048
        %v1051 = vmul.f32 %v1033, %v944
        %v1052 = vadd.f32 %v1050, %v1051
        %v1053 = vstv %s951
        %vm1054 = vcmp.gt.s32.totalorder %v588, %v1053
        %v1055 = vsel %vm1054, 1, 0
        %1056 = vset.pattern.permute.xlu0 0
        %1057 = vperm.xlu0 %1056, %v1055
        %v1058 = vpop.permute.xlu0 %1057
        %vm1059 = vcmp.eq.s32.totalorder %v1058, 1
        %v1060 = vsel %vm1059, %v1052, %v944
        %1062 = vrot.lane.b32.xlu0 %v1060, 96
        %v1063 = vpop.permute.xlu0 %1062
        %s1065 = scalar_lea.vmem %s424, %s952 [#allocation12]
        %1066 = vst.msk [vmem:[%s1065] sm:$0xff] %vm605, %v1063
        %s1067 = scalar_select %p594, 4, 3
        %s1068 = smul.u32 %s1067, 8
        %s1069 = scalar_lea.vmem [#allocation2], %s1068
        %v1070 = vld [vmem:[%s1069] sm:$0xff]
        %v1071 = vsel %vm605, %v1063, 0
        %1073 = vmatprep.subr.mxu0 0.0
        %1074 = vmatpush1.msra.mxu0 %v589
        %1075 = vmatprep.subr.mxu0 0.0
        %1076 = vmatpush1.msra.mxu0 %v590
        %1077 = vmatprep.subr.mxu0 0.0
        %1078 = vmatpush1.msra.mxu0 %v591
        %1079 = vmatprep.subr.mxu0 0.0
        %1080 = vmatpush1.msra.mxu0 %v592
        %1081 = vmatprep.subr.mxu0 0.0
        %1082 = vmatpush1.msra.mxu0 0.0
        %1083 = vmatprep.subr.mxu0 0.0
        %1084 = vmatpush1.msra.mxu0 0.0
        %1085 = vmatprep.subr.mxu0 0.0
        %1086 = vmatpush1.msra.mxu0 0.0
        %1087 = vmatprep.subr.mxu0 0.0
        %1088 = vmatpush1.msra.mxu0 0.0
        %1089 = vmatprep.subr.mxu0 0.0
        %1090 = vmatpush1.msra.mxu0 0.0
        %1091 = vmatprep.subr.mxu0 0.0
        %1092 = vmatpush1.msra.mxu0 0.0
        %1093 = vmatprep.subr.mxu0 0.0
        %1094 = vmatpush1.msra.mxu0 0.0
        %1095 = vmatprep.subr.mxu0 0.0
        %1096 = vmatpush1.msra.mxu0 0.0
        %1097 = vmatprep.subr.mxu0 0.0
        %1098 = vmatpush1.msra.mxu0 0.0
        %1099 = vmatprep.subr.mxu0 0.0
        %1100 = vmatpush1.msra.mxu0 0.0
        %1101 = vmatprep.subr.mxu0 0.0
        %1102 = vmatpush1.msra.mxu0 0.0
        %1103 = vmatprep.subr.mxu0 0.0
        %1104 = vmatpush1.msra.mxu0 0.0
        %1105 = vmatprep.subr.mxu0 0.0
        %1106 = vmatpush1.msra.mxu0 0.0
        %1107 = vmatprep.subr.mxu0 0.0
        %1108 = vmatpush1.msra.mxu0 0.0
        %1109 = vmatprep.subr.mxu0 0.0
        %1110 = vmatpush1.msra.mxu0 0.0
        %1111 = vmatprep.subr.mxu0 0.0
        %1112 = vmatpush1.msra.mxu0 0.0
        %1113 = vmatprep.subr.mxu0 0.0
        %1114 = vmatpush1.msra.mxu0 0.0
        %1115 = vmatprep.subr.mxu0 0.0
        %1116 = vmatpush1.msra.mxu0 0.0
        %1117 = vmatprep.subr.mxu0 0.0
        %1118 = vmatpush1.msra.mxu0 0.0
        %1119 = vmatprep.subr.mxu0 0.0
        %1120 = vmatpush1.msra.mxu0 0.0
        %1121 = vmatprep.subr.mxu0 0.0
        %1122 = vmatpush1.msra.mxu0 0.0
        %1123 = vmatprep.subr.mxu0 0.0
        %1124 = vmatpush1.msra.mxu0 0.0
        %1125 = vmatprep.subr.mxu0 0.0
        %1126 = vmatpush1.msra.mxu0 0.0
        %1127 = vmatprep.subr.mxu0 0.0
        %1128 = vmatpush1.msra.mxu0 0.0
        %1129 = vmatprep.subr.mxu0 0.0
        %1130 = vmatpush1.msra.mxu0 0.0
        %1131 = vmatprep.subr.mxu0 0.0
        %1132 = vmatpush1.msra.mxu0 0.0
        %1133 = vmatprep.subr.mxu0 0.0
        %1134 = vmatpush1.msra.mxu0 0.0
        %1135 = vmatprep.subr.mxu0 0.0
        %1136 = vmatpush1.msra.mxu0 0.0
        %1137 = vmatprep.mubr.f32.mxu0 0.0
        %1138 = vmatmul.mubr.f32.gmra.mrb[0].mxu0 %v1071
        %v1139 = vpop.f32.mrb[0].mxu0
        %v1140 = vadd.f32 %v603, %v1139
        %v1141 = vpop.f32.mrb[0].mxu0
        %1142 = vdwg.mxu0
        %v1143 = vadd.f32 %v1070, %v1140
        %v1144 = vxor.u32 %v1143, 2147483648
        %v1145 = vmul.f32 %v1144, 1.442695
        %v1146 = vpow.pop %v1145
        %v1147 = vadd.f32 %v1146, 1.0
        %v1148 = vrcp.pop %v1147
        %v1149 = vmul.f32 1.0, %v1148
        %1151 = vrot.lane.b32.xlu0 %v1140, 64
        %v1152 = vpop.permute.xlu0 %1151
        %v1154 = vmul.f32 %v1149, %v1152
        %1156 = vrot.lane.b32.xlu0 %v1154, 64
        %v1157 = vpop.permute.xlu0 %1156
        %v1159 = vadd.f32 %v1070, %v1157
        %v1160 = vtanh.pop %v1159
        %v1161 = vsub.f32 1.0, %v1149
        %1163 = vrot.lane.b32.xlu0 %v1160, 96
        %v1164 = vpop.permute.xlu0 %1163
        %v1166 = vmul.f32 %v1161, %v1164
        %v1167 = vmul.f32 %v1149, %v1060
        %v1168 = vadd.f32 %v1166, %v1167
        %v1169 = vstv %s1067
        %vm1170 = vcmp.gt.s32.totalorder %v588, %v1169
        %v1171 = vsel %vm1170, 1, 0
        %1172 = vset.pattern.permute.xlu0 0
        %1173 = vperm.xlu0 %1172, %v1171
        %v1174 = vpop.permute.xlu0 %1173
        %vm1175 = vcmp.eq.s32.totalorder %v1174, 1
        %v1176 = vsel %vm1175, %v1168, %v1060
        %1178 = vrot.lane.b32.xlu0 %v1176, 96
        %v1179 = vpop.permute.xlu0 %1178
        %s1181 = scalar_lea.vmem %s424, %s1068 [#allocation12]
        %1182 = vst.msk [vmem:[%s1181] sm:$0xff] %vm605, %v1179
        %s1183 = scalar_select %p594, 5, 2
        %s1184 = smul.u32 %s1183, 8
        %s1185 = scalar_lea.vmem [#allocation2], %s1184
        %v1186 = vld [vmem:[%s1185] sm:$0xff]
        %v1187 = vsel %vm605, %v1179, 0
        %1189 = vmatprep.subr.mxu0 0.0
        %1190 = vmatpush1.msra.mxu0 %v589
        %1191 = vmatprep.subr.mxu0 0.0
        %1192 = vmatpush1.msra.mxu0 %v590
        %1193 = vmatprep.subr.mxu0 0.0
        %1194 = vmatpush1.msra.mxu0 %v591
        %1195 = vmatprep.subr.mxu0 0.0
        %1196 = vmatpush1.msra.mxu0 %v592
        %1197 = vmatprep.subr.mxu0 0.0
        %1198 = vmatpush1.msra.mxu0 0.0
        %1199 = vmatprep.subr.mxu0 0.0
        %1200 = vmatpush1.msra.mxu0 0.0
        %1201 = vmatprep.subr.mxu0 0.0
        %1202 = vmatpush1.msra.mxu0 0.0
        %1203 = vmatprep.subr.mxu0 0.0
        %1204 = vmatpush1.msra.mxu0 0.0
        %1205 = vmatprep.subr.mxu0 0.0
        %1206 = vmatpush1.msra.mxu0 0.0
        %1207 = vmatprep.subr.mxu0 0.0
        %1208 = vmatpush1.msra.mxu0 0.0
        %1209 = vmatprep.subr.mxu0 0.0
        %1210 = vmatpush1.msra.mxu0 0.0
        %1211 = vmatprep.subr.mxu0 0.0
        %1212 = vmatpush1.msra.mxu0 0.0
        %1213 = vmatprep.subr.mxu0 0.0
        %1214 = vmatpush1.msra.mxu0 0.0
        %1215 = vmatprep.subr.mxu0 0.0
        %1216 = vmatpush1.msra.mxu0 0.0
        %1217 = vmatprep.subr.mxu0 0.0
        %1218 = vmatpush1.msra.mxu0 0.0
        %1219 = vmatprep.subr.mxu0 0.0
        %1220 = vmatpush1.msra.mxu0 0.0
        %1221 = vmatprep.subr.mxu0 0.0
        %1222 = vmatpush1.msra.mxu0 0.0
        %1223 = vmatprep.subr.mxu0 0.0
        %1224 = vmatpush1.msra.mxu0 0.0
        %1225 = vmatprep.subr.mxu0 0.0
        %1226 = vmatpush1.msra.mxu0 0.0
        %1227 = vmatprep.subr.mxu0 0.0
        %1228 = vmatpush1.msra.mxu0 0.0
        %1229 = vmatprep.subr.mxu0 0.0
        %1230 = vmatpush1.msra.mxu0 0.0
        %1231 = vmatprep.subr.mxu0 0.0
        %1232 = vmatpush1.msra.mxu0 0.0
        %1233 = vmatprep.subr.mxu0 0.0
        %1234 = vmatpush1.msra.mxu0 0.0
        %1235 = vmatprep.subr.mxu0 0.0
        %1236 = vmatpush1.msra.mxu0 0.0
        %1237 = vmatprep.subr.mxu0 0.0
        %1238 = vmatpush1.msra.mxu0 0.0
        %1239 = vmatprep.subr.mxu0 0.0
        %1240 = vmatpush1.msra.mxu0 0.0
        %1241 = vmatprep.subr.mxu0 0.0
        %1242 = vmatpush1.msra.mxu0 0.0
        %1243 = vmatprep.subr.mxu0 0.0
        %1244 = vmatpush1.msra.mxu0 0.0
        %1245 = vmatprep.subr.mxu0 0.0
        %1246 = vmatpush1.msra.mxu0 0.0
        %1247 = vmatprep.subr.mxu0 0.0
        %1248 = vmatpush1.msra.mxu0 0.0
        %1249 = vmatprep.subr.mxu0 0.0
        %1250 = vmatpush1.msra.mxu0 0.0
        %1251 = vmatprep.subr.mxu0 0.0
        %1252 = vmatpush1.msra.mxu0 0.0
        %1253 = vmatprep.mubr.f32.mxu0 0.0
        %1254 = vmatmul.mubr.f32.gmra.mrb[0].mxu0 %v1187
        %v1255 = vpop.f32.mrb[0].mxu0
        %v1256 = vadd.f32 %v603, %v1255
        %v1257 = vpop.f32.mrb[0].mxu0
        %1258 = vdwg.mxu0
        %v1259 = vadd.f32 %v1186, %v1256
        %v1260 = vxor.u32 %v1259, 2147483648
        %v1261 = vmul.f32 %v1260, 1.442695
        %v1262 = vpow.pop %v1261
        %v1263 = vadd.f32 %v1262, 1.0
        %v1264 = vrcp.pop %v1263
        %v1265 = vmul.f32 1.0, %v1264
        %1267 = vrot.lane.b32.xlu0 %v1256, 64
        %v1268 = vpop.permute.xlu0 %1267
        %v1270 = vmul.f32 %v1265, %v1268
        %1272 = vrot.lane.b32.xlu0 %v1270, 64
        %v1273 = vpop.permute.xlu0 %1272
        %v1275 = vadd.f32 %v1186, %v1273
        %v1276 = vtanh.pop %v1275
        %v1277 = vsub.f32 1.0, %v1265
        %1279 = vrot.lane.b32.xlu0 %v1276, 96
        %v1280 = vpop.permute.xlu0 %1279
        %v1282 = vmul.f32 %v1277, %v1280
        %v1283 = vmul.f32 %v1265, %v1176
        %v1284 = vadd.f32 %v1282, %v1283
        %v1285 = vstv %s1183
        %vm1286 = vcmp.gt.s32.totalorder %v588, %v1285
        %v1287 = vsel %vm1286, 1, 0
        %1288 = vset.pattern.permute.xlu0 0
        %1289 = vperm.xlu0 %1288, %v1287
        %v1290 = vpop.permute.xlu0 %1289
        %vm1291 = vcmp.eq.s32.totalorder %v1290, 1
        %v1292 = vsel %vm1291, %v1284, %v1176
        %1294 = vrot.lane.b32.xlu0 %v1292, 96
        %v1295 = vpop.permute.xlu0 %1294
        %s1297 = scalar_lea.vmem %s424, %s1184 [#allocation12]
        %1298 = vst.msk [vmem:[%s1297] sm:$0xff] %vm605, %v1295
        %s1299 = scalar_select %p594, 6, 1
        %s1300 = smul.u32 %s1299, 8
        %s1301 = scalar_lea.vmem [#allocation2], %s1300
        %v1302 = vld [vmem:[%s1301] sm:$0xff]
        %v1303 = vsel %vm605, %v1295, 0
        %1305 = vmatprep.subr.mxu0 0.0
        %1306 = vmatpush1.msra.mxu0 %v589
        %1307 = vmatprep.subr.mxu0 0.0
        %1308 = vmatpush1.msra.mxu0 %v590
        %1309 = vmatprep.subr.mxu0 0.0
        %1310 = vmatpush1.msra.mxu0 %v591
        %1311 = vmatprep.subr.mxu0 0.0
        %1312 = vmatpush1.msra.mxu0 %v592
        %1313 = vmatprep.subr.mxu0 0.0
        %1314 = vmatpush1.msra.mxu0 0.0
        %1315 = vmatprep.subr.mxu0 0.0
        %1316 = vmatpush1.msra.mxu0 0.0
        %1317 = vmatprep.subr.mxu0 0.0
        %1318 = vmatpush1.msra.mxu0 0.0
        %1319 = vmatprep.subr.mxu0 0.0
        %1320 = vmatpush1.msra.mxu0 0.0
        %1321 = vmatprep.subr.mxu0 0.0
        %1322 = vmatpush1.msra.mxu0 0.0
        %1323 = vmatprep.subr.mxu0 0.0
        %1324 = vmatpush1.msra.mxu0 0.0
        %1325 = vmatprep.subr.mxu0 0.0
        %1326 = vmatpush1.msra.mxu0 0.0
        %1327 = vmatprep.subr.mxu0 0.0
        %1328 = vmatpush1.msra.mxu0 0.0
        %1329 = vmatprep.subr.mxu0 0.0
        %1330 = vmatpush1.msra.mxu0 0.0
        %1331 = vmatprep.subr.mxu0 0.0
        %1332 = vmatpush1.msra.mxu0 0.0
        %1333 = vmatprep.subr.mxu0 0.0
        %1334 = vmatpush1.msra.mxu0 0.0
        %1335 = vmatprep.subr.mxu0 0.0
        %1336 = vmatpush1.msra.mxu0 0.0
        %1337 = vmatprep.subr.mxu0 0.0
        %1338 = vmatpush1.msra.mxu0 0.0
        %1339 = vmatprep.subr.mxu0 0.0
        %1340 = vmatpush1.msra.mxu0 0.0
        %1341 = vmatprep.subr.mxu0 0.0
        %1342 = vmatpush1.msra.mxu0 0.0
        %1343 = vmatprep.subr.mxu0 0.0
        %1344 = vmatpush1.msra.mxu0 0.0
        %1345 = vmatprep.subr.mxu0 0.0
        %1346 = vmatpush1.msra.mxu0 0.0
        %1347 = vmatprep.subr.mxu0 0.0
        %1348 = vmatpush1.msra.mxu0 0.0
        %1349 = vmatprep.subr.mxu0 0.0
        %1350 = vmatpush1.msra.mxu0 0.0
        %1351 = vmatprep.subr.mxu0 0.0
        %1352 = vmatpush1.msra.mxu0 0.0
        %1353 = vmatprep.subr.mxu0 0.0
        %1354 = vmatpush1.msra.mxu0 0.0
        %1355 = vmatprep.subr.mxu0 0.0
        %1356 = vmatpush1.msra.mxu0 0.0
        %1357 = vmatprep.subr.mxu0 0.0
        %1358 = vmatpush1.msra.mxu0 0.0
        %1359 = vmatprep.subr.mxu0 0.0
        %1360 = vmatpush1.msra.mxu0 0.0
        %1361 = vmatprep.subr.mxu0 0.0
        %1362 = vmatpush1.msra.mxu0 0.0
        %1363 = vmatprep.subr.mxu0 0.0
        %1364 = vmatpush1.msra.mxu0 0.0
        %1365 = vmatprep.subr.mxu0 0.0
        %1366 = vmatpush1.msra.mxu0 0.0
        %1367 = vmatprep.subr.mxu0 0.0
        %1368 = vmatpush1.msra.mxu0 0.0
        %1369 = vmatprep.mubr.f32.mxu0 0.0
        %1370 = vmatmul.mubr.f32.gmra.mrb[0].mxu0 %v1303
        %v1371 = vpop.f32.mrb[0].mxu0
        %v1372 = vadd.f32 %v603, %v1371
        %v1373 = vpop.f32.mrb[0].mxu0
        %1374 = vdwg.mxu0
        %v1375 = vadd.f32 %v1302, %v1372
        %v1376 = vxor.u32 %v1375, 2147483648
        %v1377 = vmul.f32 %v1376, 1.442695
        %v1378 = vpow.pop %v1377
        %v1379 = vadd.f32 %v1378, 1.0
        %v1380 = vrcp.pop %v1379
        %v1381 = vmul.f32 1.0, %v1380
        %1383 = vrot.lane.b32.xlu0 %v1372, 64
        %v1384 = vpop.permute.xlu0 %1383
        %v1386 = vmul.f32 %v1381, %v1384
        %1388 = vrot.lane.b32.xlu0 %v1386, 64
        %v1389 = vpop.permute.xlu0 %1388
        %v1391 = vadd.f32 %v1302, %v1389
        %v1392 = vtanh.pop %v1391
        %v1393 = vsub.f32 1.0, %v1381
        %1395 = vrot.lane.b32.xlu0 %v1392, 96
        %v1396 = vpop.permute.xlu0 %1395
        %v1398 = vmul.f32 %v1393, %v1396
        %v1399 = vmul.f32 %v1381, %v1292
        %v1400 = vadd.f32 %v1398, %v1399
        %v1401 = vstv %s1299
        %vm1402 = vcmp.gt.s32.totalorder %v588, %v1401
        %v1403 = vsel %vm1402, 1, 0
        %1404 = vset.pattern.permute.xlu0 0
        %1405 = vperm.xlu0 %1404, %v1403
        %v1406 = vpop.permute.xlu0 %1405
        %vm1407 = vcmp.eq.s32.totalorder %v1406, 1
        %v1408 = vsel %vm1407, %v1400, %v1292
        %1410 = vrot.lane.b32.xlu0 %v1408, 96
        %v1411 = vpop.permute.xlu0 %1410
        %s1413 = scalar_lea.vmem %s424, %s1300 [#allocation12]
        %1414 = vst.msk [vmem:[%s1413] sm:$0xff] %vm605, %v1411
        %s1415 = scalar_select %p594, 7, 0
        %s1416 = smul.u32 %s1415, 8
        %s1417 = scalar_lea.vmem [#allocation2], %s1416
        %v1418 = vld [vmem:[%s1417] sm:$0xff]
        %v1419 = vsel %vm605, %v1411, 0
        %1421 = vmatprep.subr.mxu0 0.0
        %1422 = vmatpush1.msra.mxu0 %v589
        %1423 = vmatprep.subr.mxu0 0.0
        %1424 = vmatpush1.msra.mxu0 %v590
        %1425 = vmatprep.subr.mxu0 0.0
        %1426 = vmatpush1.msra.mxu0 %v591
        %1427 = vmatprep.subr.mxu0 0.0
        %1428 = vmatpush1.msra.mxu0 %v592
        %1429 = vmatprep.subr.mxu0 0.0
        %1430 = vmatpush1.msra.mxu0 0.0
        %1431 = vmatprep.subr.mxu0 0.0
        %1432 = vmatpush1.msra.mxu0 0.0
        %1433 = vmatprep.subr.mxu0 0.0
        %1434 = vmatpush1.msra.mxu0 0.0
        %1435 = vmatprep.subr.mxu0 0.0
        %1436 = vmatpush1.msra.mxu0 0.0
        %1437 = vmatprep.subr.mxu0 0.0
        %1438 = vmatpush1.msra.mxu0 0.0
        %1439 = vmatprep.subr.mxu0 0.0
        %1440 = vmatpush1.msra.mxu0 0.0
        %1441 = vmatprep.subr.mxu0 0.0
        %1442 = vmatpush1.msra.mxu0 0.0
        %1443 = vmatprep.subr.mxu0 0.0
        %1444 = vmatpush1.msra.mxu0 0.0
        %1445 = vmatprep.subr.mxu0 0.0
        %1446 = vmatpush1.msra.mxu0 0.0
        %1447 = vmatprep.subr.mxu0 0.0
        %1448 = vmatpush1.msra.mxu0 0.0
        %1449 = vmatprep.subr.mxu0 0.0
        %1450 = vmatpush1.msra.mxu0 0.0
        %1451 = vmatprep.subr.mxu0 0.0
        %1452 = vmatpush1.msra.mxu0 0.0
        %1453 = vmatprep.subr.mxu0 0.0
        %1454 = vmatpush1.msra.mxu0 0.0
        %1455 = vmatprep.subr.mxu0 0.0
        %1456 = vmatpush1.msra.mxu0 0.0
        %1457 = vmatprep.subr.mxu0 0.0
        %1458 = vmatpush1.msra.mxu0 0.0
        %1459 = vmatprep.subr.mxu0 0.0
        %1460 = vmatpush1.msra.mxu0 0.0
        %1461 = vmatprep.subr.mxu0 0.0
        %1462 = vmatpush1.msra.mxu0 0.0
        %1463 = vmatprep.subr.mxu0 0.0
        %1464 = vmatpush1.msra.mxu0 0.0
        %1465 = vmatprep.subr.mxu0 0.0
        %1466 = vmatpush1.msra.mxu0 0.0
        %1467 = vmatprep.subr.mxu0 0.0
        %1468 = vmatpush1.msra.mxu0 0.0
        %1469 = vmatprep.subr.mxu0 0.0
        %1470 = vmatpush1.msra.mxu0 0.0
        %1471 = vmatprep.subr.mxu0 0.0
        %1472 = vmatpush1.msra.mxu0 0.0
        %1473 = vmatprep.subr.mxu0 0.0
        %1474 = vmatpush1.msra.mxu0 0.0
        %1475 = vmatprep.subr.mxu0 0.0
        %1476 = vmatpush1.msra.mxu0 0.0
        %1477 = vmatprep.subr.mxu0 0.0
        %1478 = vmatpush1.msra.mxu0 0.0
        %1479 = vmatprep.subr.mxu0 0.0
        %1480 = vmatpush1.msra.mxu0 0.0
        %1481 = vmatprep.subr.mxu0 0.0
        %1482 = vmatpush1.msra.mxu0 0.0
        %1483 = vmatprep.subr.mxu0 0.0
        %1484 = vmatpush1.msra.mxu0 0.0
        %1485 = vmatprep.mubr.f32.mxu0 0.0
        %1486 = vmatmul.mubr.f32.gmra.mrb[0].mxu0 %v1419
        %v1487 = vpop.f32.mrb[0].mxu0
        %v1488 = vadd.f32 %v603, %v1487
        %v1489 = vpop.f32.mrb[0].mxu0
        %1490 = vdwg.mxu0
        %v1491 = vadd.f32 %v1418, %v1488
        %v1492 = vxor.u32 %v1491, 2147483648
        %v1493 = vmul.f32 %v1492, 1.442695
        %v1494 = vpow.pop %v1493
        %v1495 = vadd.f32 %v1494, 1.0
        %v1496 = vrcp.pop %v1495
        %v1497 = vmul.f32 1.0, %v1496
        %1499 = vrot.lane.b32.xlu0 %v1488, 64
        %v1500 = vpop.permute.xlu0 %1499
        %v1502 = vmul.f32 %v1497, %v1500
        %1504 = vrot.lane.b32.xlu0 %v1502, 64
        %v1505 = vpop.permute.xlu0 %1504
        %v1507 = vadd.f32 %v1418, %v1505
        %v1508 = vtanh.pop %v1507
        %v1509 = vsub.f32 1.0, %v1497
        %1511 = vrot.lane.b32.xlu0 %v1508, 96
        %v1512 = vpop.permute.xlu0 %1511
        %v1514 = vmul.f32 %v1509, %v1512
        %v1515 = vmul.f32 %v1497, %v1408
        %v1516 = vadd.f32 %v1514, %v1515
        %v1517 = vstv %s1415
        %vm1518 = vcmp.gt.s32.totalorder %v588, %v1517
        %v1519 = vsel %vm1518, 1, 0
        %1520 = vset.pattern.permute.xlu0 0
        %1521 = vperm.xlu0 %1520, %v1519
        %v1522 = vpop.permute.xlu0 %1521
        %vm1523 = vcmp.eq.s32.totalorder %v1522, 1
        %v1524 = vsel %vm1523, %v1516, %v1408
        %1526 = vrot.lane.b32.xlu0 %v1524, 96
        %v1527 = vpop.permute.xlu0 %1526
        %s1529 = scalar_lea.vmem %s424, %s1416 [#allocation12]
        %1530 = vst.msk [vmem:[%s1529] sm:$0xff] %vm605, %v1527
        %1531 = vst.msk [vmem:[%s431] sm:$0xff] %vm605, %v1527
        %s1532 = sand.u32 %s181, 1
        %s1533 = scalar_lea.sflag [#allocation5], %s1532
        %s1534 = sand.u32 %s181, 1
        %s1535 = smul.addr %s1534, 64
        %s1536 = scalar_lea.vmem [#allocation12], %s1535
        %s1537 = sand.u32 %s207, 1
        %s1538 = scalar_lea.sflag [#allocation14], %s1537
        %s1539 = sand.u32 %s207, 1
        %s1540 = smul.addr %s1539, 8
        %s1541 = scalar_lea.vmem [#allocation13], %s1540
        // Predicated region
        $region69: #{tpu_custom_call.1} parent=43 // pred_check
          %p1542 = pneg %p191
        $region70: #{tpu_custom_call.1} parent=43 // pred_check_branch
          %1544 = sbr.rel (%p1542) target = $region72
        $region71: #{tpu_custom_call.1} parent=43 // pred_region
          %s1546 = ssub.s32 1024, 1024
          %1547 = vsyncadd %s1533, %s1546
          %s1548 = smul.addr %s27, 8
          %s1549 = smul.addr %s1548, 128
          %s1550 = scalar_lea.hbm %s6, %s1549
          %s1551 = sshll.u32 %s1536, 4
          %s1552 = int_to_ptr.vmem [resolvable:$true] %s1551
          %1557 = dma.vmem_to_hbm [thread:$0]  %s1552, 1024, %s1550, %s1533, 128, 128, 8
        $region72: #{tpu_custom_call.1} parent=43 // pred_fallthru
          _
        // Predicated region
        $region73: #{tpu_custom_call.1} parent=43 // pred_check
          %p1558 = pneg %p217
        $region74: #{tpu_custom_call.1} parent=43 // pred_check_branch
          %1560 = sbr.rel (%p1558) target = $region76
        $region75: #{tpu_custom_call.1} parent=43 // pred_region
          %s1562 = ssub.s32 128, 128
          %1563 = vsyncadd %s1538, %s1562
          %s1564 = smul.addr %s27, 128
          %s1565 = scalar_lea.hbm %s7, %s1564
          %s1567 = sshll.u32 %s1541, 4
          %s1568 = int_to_ptr.vmem [resolvable:$true] %s1567
          %1570 = dma.vmem_to_hbm [thread:$0]  %s1568, 128, %s1565, %s1538
        $region76: #{tpu_custom_call.1} parent=43 // pred_fallthru
          _
      $region44: #{tpu_custom_call.1} parent=5 // pred_fallthru
        _
      %p1571 = scmp.le.s32.totalorder 2, %s22
      // Predicated region
      $region77: #{tpu_custom_call.1} parent=5 // pred_check
        %p1572 = pneg %p1571
      $region78: #{tpu_custom_call.1} parent=5 // pred_check_branch
        %1574 = sbr.rel (%p1572) target = $region80
      $region79: #{tpu_custom_call.1} parent=5 // pred_region
        %s1575 = ssub.s32 %s22, 2
        // Predicated region
        $region81: #{tpu_custom_call.1} parent=79 // pred_check
          %p1576 = pneg %p197
        $region82: #{tpu_custom_call.1} parent=79 // pred_check_branch
          %1578 = sbr.rel (%p1576) target = $region84
        $region83: #{tpu_custom_call.1} parent=79 // pred_region
          %s1579 = sand.u32 %s182, 1
          %s1580 = scalar_lea.sflag [#allocation5], %s1579
          %s1581 = sand.u32 %s182, 1
          %s1582 = smul.addr %s1581, 64
          %s1583 = scalar_lea.vmem [#allocation12], %s1582
          %1584 = dma.done %s1580, 1024
        $region84: #{tpu_custom_call.1} parent=79 // pred_fallthru
          _
        // Predicated region
        $region85: #{tpu_custom_call.1} parent=79 // pred_check
          %p1585 = pneg %p223
        $region86: #{tpu_custom_call.1} parent=79 // pred_check_branch
          %1587 = sbr.rel (%p1585) target = $region88
        $region87: #{tpu_custom_call.1} parent=79 // pred_region
          %s1588 = sand.u32 %s208, 1
          %s1589 = scalar_lea.sflag [#allocation14], %s1588
          %s1590 = sand.u32 %s208, 1
          %s1591 = smul.addr %s1590, 8
          %s1592 = scalar_lea.vmem [#allocation13], %s1591
          %1593 = dma.done %s1589, 128
        $region88: #{tpu_custom_call.1} parent=79 // pred_fallthru
          _
      $region80: #{tpu_custom_call.1} parent=5 // pred_fallthru
        _
    $region6: #{tpu_custom_call.1} parent=1 // loop_footer
      %s26 = sadd.s32 1, %s22
    $region7: #{tpu_custom_call.1} parent=1 // loop_footer_branch
      %21 = sbr.rel target = $region3
    $region8: #{tpu_custom_call.1} parent=1 // loop_exit
      _
    %1594 = vsyncpa [#allocation4], 1
    %s1595 = scalar_lea.sflag [#allocation4], 1
    %1596 = vsyncpa %s1595, 1
    %1597 = vsyncpa [#allocation7], 1
    %1598 = vsyncpa [#allocation5], 1
    %s1599 = scalar_lea.sflag [#allocation5], 1
    %1600 = vsyncpa %s1599, 1
    %1601 = vsyncpa [#allocation14], 1
    %s1602 = scalar_lea.sflag [#allocation14], 1
    %1603 = vsyncpa %s1602, 1

</llo_original>
